<compile_context>
chip_gen: v7x
topology: tpu7x:2x2x1
jax: 0.10.0
libtpu: 0.0.40
codegen_flags: <defaults>
</compile_context>

<pallas_src>
import functools
import math

import jax
import jax.numpy as jnp
from jax.experimental import pallas as pl
from jax.experimental.pallas import tpu as pltpu


def mhsa_kernel(x_ref, wq_ref, bq_ref, wk_ref, bk_ref, wv_ref, bv_ref,
                wo_ref, bo_ref, o_ref, *, num_heads, dk):
    # x_ref:  (1, S, H)  compute dtype (bf16)      w{q,k,v,o}_ref: (H, H) compute dtype
    # b{q,k,v,o}_ref: (1, H) f32                   o_ref: (1, S, H) f32
    x = x_ref[0]                       # (S, H)
    cdt = x.dtype                      # compute dtype for MXU inputs
    scale = 1.0 / math.sqrt(dk)

    # Fused projections for all heads: one MXU matmul each, f32 accumulation,
    # bias added in f32 (keeps elementwise math off bf16 — v5e has no bf16 VPU).
    q = jnp.dot(x, wq_ref[...], preferred_element_type=jnp.float32) + bq_ref[...]
    k = jnp.dot(x, wk_ref[...], preferred_element_type=jnp.float32) + bk_ref[...]
    v = jnp.dot(x, wv_ref[...], preferred_element_type=jnp.float32) + bv_ref[...]

    head_outs = []
    for h in range(num_heads):                     # static unroll (small num_heads)
        lo, hi = h * dk, (h + 1) * dk
        qh = q[:, lo:hi].astype(cdt)               # (S, dk)
        kh = k[:, lo:hi].astype(cdt)
        vh = v[:, lo:hi].astype(cdt)

        # scores = q @ k^T / sqrt(dk): contract over dk, no explicit transpose.
        s = jax.lax.dot_general(
            qh, kh,
            dimension_numbers=(((1,), (1,)), ((), ())),
            preferred_element_type=jnp.float32) * scale       # (S, S) f32

        # Numerically-stable softmax over keys (f32); reciprocal on the EUP slot.
        s = s - jnp.max(s, axis=-1, keepdims=True)
        p = jnp.exp(s)
        p = p * pl.reciprocal(jnp.sum(p, axis=-1, keepdims=True), approx=True)
        # TODO(synk): training-mode dropout on p would go here (pltpu.prng_*).

        head_outs.append(
            jnp.dot(p.astype(cdt), vh, preferred_element_type=jnp.float32))  # (S, dk)

    concat = jnp.concatenate(head_outs, axis=-1)              # (S, H) f32
    out = jnp.dot(concat.astype(cdt), wo_ref[...],
                  preferred_element_type=jnp.float32) + bo_ref[...]
    # Output dropout: eval-mode identity.
    o_ref[0] = out.astype(o_ref.dtype)


def mhsa_forward(x, params, *, num_heads, compute_dtype=jnp.bfloat16):
    """x: (B, S, H) f32. params = (wq, bq, wk, bk, wv, bv, wo, bo) in (in, out) layout.

    Returns the projected attention output (B, S, H) in f32.
    """
    B, S, H = x.shape
    assert H % num_heads == 0
    dk = H // num_heads
    wq, bq, wk, bk, wv, bv, wo, bo = params
    cdt = compute_dtype

    w_spec = pl.BlockSpec((H, H), lambda b: (0, 0))   # weights resident across grid
    b_spec = pl.BlockSpec((1, H), lambda b: (0, 0))   # biases resident across grid

    kernel = functools.partial(mhsa_kernel, num_heads=num_heads, dk=dk)
    out = pl.pallas_call(
        kernel,
        out_shape=jax.ShapeDtypeStruct((B, S, H), jnp.float32),
        grid_spec=pltpu.PrefetchScalarGridSpec(
            num_scalar_prefetch=0,
            grid=(B,),                                         # tile over batch
            in_specs=[
                pl.BlockSpec((1, S, H), lambda b: (b, 0, 0)),  # x: per-batch tile
                w_spec, b_spec,                                # Wq, bq
                w_spec, b_spec,                                # Wk, bk
                w_spec, b_spec,                                # Wv, bv
                w_spec, b_spec,                                # Wo, bo
            ],
            out_specs=pl.BlockSpec((1, S, H), lambda b: (b, 0, 0)),
        ),
        compiler_params=pltpu.CompilerParams(
            # parallel batch axis -> sharded across TensorCores on v7x (no-op on v5e/v6e)
            dimension_semantics=("parallel",),
            # explicit budget: safe under v7x's 64 MiB physical / 32 MiB scoped VMEM
            vmem_limit_bytes=32 * 1024 * 1024,
        ),
    )(
        x.astype(cdt),
        wq.astype(cdt), bq.astype(jnp.float32),
        wk.astype(cdt), bk.astype(jnp.float32),
        wv.astype(cdt), bv.astype(jnp.float32),
        wo.astype(cdt), bo.astype(jnp.float32),
    )
    return out


def init_params(key, hidden_size, num_heads):
    """nn.Linear-style init, U(-1/sqrt(fan_in), 1/sqrt(fan_in)).

    Per-head Q/K/V Linears (H -> dk) are stored concatenated along the output
    axis in (in, out) layout (== torch weight.T), so the kernel does x @ W + b.
    """
    del num_heads  # heads share fan_in = hidden_size; combined layout covers all heads
    ks = jax.random.split(key, 8)
    bound = 1.0 / math.sqrt(hidden_size)
    H = hidden_size

    def u(k, shape):
        return jax.random.uniform(k, shape, jnp.float32, -bound, bound)

    wq, bq = u(ks[0], (H, H)), u(ks[1], (1, H))
    wk, bk = u(ks[2], (H, H)), u(ks[3], (1, H))
    wv, bv = u(ks[4], (H, H)), u(ks[5], (1, H))
    wo, bo = u(ks[6], (H, H)), u(ks[7], (1, H))   # output projection (all_head_size -> H)
    return wq, bq, wk, bk, wv, bv, wo, bo


def mhsa_reference(x, params, num_heads):
    """Plain-JAX f32 reference matching the PyTorch module (eval-mode dropout)."""
    B, S, H = x.shape
    dk = H // num_heads
    wq, bq, wk, bk, wv, bv, wo, bo = params
    q = x @ wq + bq
    k = x @ wk + bk
    v = x @ wv + bv
    outs = []
    for h in range(num_heads):
        sl = slice(h * dk, (h + 1) * dk)
        s = (q[..., sl] @ jnp.swapaxes(k[..., sl], -1, -2)) / math.sqrt(dk)
        p = jax.nn.softmax(s, axis=-1)
        outs.append(p @ v[..., sl])
    concat = jnp.concatenate(outs, axis=-1)
    return concat @ wo + bo


if __name__ == "__main__":
    hidden_size = 128     # lane-dense (=128) output per the perf review
    num_heads = 8         # dk = 16 per head
    batch, seq = 2, 16
    dropout_prob = 0.2    # eval-mode -> identity

    key = jax.random.PRNGKey(0)
    kx, kp = jax.random.split(key)
    x = jax.random.normal(kx, (batch, seq, hidden_size), jnp.float32)
    params = init_params(kp, hidden_size, num_heads)

    out = mhsa_forward(x, params, num_heads=num_heads)
    out = jax.block_until_ready(out)

    ref = mhsa_reference(x, params, num_heads)
    assert out.shape == ref.shape
    # bf16 MXU inputs with f32 accumulation -> loosened tolerance vs the f32 reference.
    assert jnp.allclose(out, ref, atol=3e-2, rtol=3e-2), "mismatch vs reference"

    print("KERNEL_OK")
</pallas_src>

<mosaic_0001>
module attributes {stable_mosaic.version = 11 : i64} {
  func.func @mhsa_kernel(%arg0: i32, %arg1: memref<1x16x128xbf16, #tpu.memory_space<vmem>>, %arg2: memref<128x128xbf16, #tpu.memory_space<vmem>>, %arg3: memref<1x128xf32, #tpu.memory_space<vmem>>, %arg4: memref<128x128xbf16, #tpu.memory_space<vmem>>, %arg5: memref<1x128xf32, #tpu.memory_space<vmem>>, %arg6: memref<128x128xbf16, #tpu.memory_space<vmem>>, %arg7: memref<1x128xf32, #tpu.memory_space<vmem>>, %arg8: memref<128x128xbf16, #tpu.memory_space<vmem>>, %arg9: memref<1x128xf32, #tpu.memory_space<vmem>>, %arg10: memref<1x16x128xf32, #tpu.memory_space<vmem>>) attributes {dimension_semantics = [#tpu.dimension_semantics<parallel>], iteration_bounds = array<i64: 2>, scalar_prefetch = 0 : i64, scratch_operands = 0 : i64, tpu.core_type = #tpu.core_type<tc>, window_params = [{transform_indices = @transform_0, window_bounds = array<i64: 1, 16, 128>}, {pipeline_mode = #tpu.pipeline_mode<synchronous>, transform_indices = @transform_1, window_bounds = array<i64: 128, 128>}, {pipeline_mode = #tpu.pipeline_mode<synchronous>, transform_indices = @transform_2, window_bounds = array<i64: 1, 128>}, {pipeline_mode = #tpu.pipeline_mode<synchronous>, transform_indices = @transform_3, window_bounds = array<i64: 128, 128>}, {pipeline_mode = #tpu.pipeline_mode<synchronous>, transform_indices = @transform_4, window_bounds = array<i64: 1, 128>}, {pipeline_mode = #tpu.pipeline_mode<synchronous>, transform_indices = @transform_5, window_bounds = array<i64: 128, 128>}, {pipeline_mode = #tpu.pipeline_mode<synchronous>, transform_indices = @transform_6, window_bounds = array<i64: 1, 128>}, {pipeline_mode = #tpu.pipeline_mode<synchronous>, transform_indices = @transform_7, window_bounds = array<i64: 128, 128>}, {pipeline_mode = #tpu.pipeline_mode<synchronous>, transform_indices = @transform_8, window_bounds = array<i64: 1, 128>}, {transform_indices = @transform_9, window_bounds = array<i64: 1, 16, 128>}]} {
    %c0 = arith.constant 0 : index
    %c0_0 = arith.constant 0 : index
    %c0_1 = arith.constant 0 : index
    %0 = vector.load %arg1[%c0, %c0_0, %c0_1] : memref<1x16x128xbf16, #tpu.memory_space<vmem>>, vector<1x16x128xbf16>
    %1 = vector.shape_cast %0 : vector<1x16x128xbf16> to vector<16x128xbf16>
    %c0_2 = arith.constant 0 : index
    %c0_3 = arith.constant 0 : index
    %2 = vector.load %arg2[%c0_2, %c0_3] : memref<128x128xbf16, #tpu.memory_space<vmem>>, vector<128x128xbf16>
    %cst = arith.constant dense<0.000000e+00> : vector<16x128xf32>
    %3 = tpu.matmul %1, %2, %cst {dimension_numbers = #tpu.dot_dimension_numbers<[1], [0], [0], [1], [0, 0, 1, 1], [], []>} : vector<16x128xbf16>, vector<128x128xbf16>, vector<16x128xf32> -> vector<16x128xf32>
    %c0_4 = arith.constant 0 : index
    %c0_5 = arith.constant 0 : index
    %4 = vector.load %arg3[%c0_4, %c0_5] : memref<1x128xf32, #tpu.memory_space<vmem>>, vector<1x128xf32>
    %5 = vector.broadcast %4 : vector<1x128xf32> to vector<16x128xf32>
    %6 = arith.addf %3, %5 : vector<16x128xf32>
    %c0_6 = arith.constant 0 : index
    %c0_7 = arith.constant 0 : index
    %7 = vector.load %arg4[%c0_6, %c0_7] : memref<128x128xbf16, #tpu.memory_space<vmem>>, vector<128x128xbf16>
    %cst_8 = arith.constant dense<0.000000e+00> : vector<16x128xf32>
    %8 = tpu.matmul %1, %7, %cst_8 {dimension_numbers = #tpu.dot_dimension_numbers<[1], [0], [0], [1], [0, 0, 1, 1], [], []>} : vector<16x128xbf16>, vector<128x128xbf16>, vector<16x128xf32> -> vector<16x128xf32>
    %c0_9 = arith.constant 0 : index
    %c0_10 = arith.constant 0 : index
    %9 = vector.load %arg5[%c0_9, %c0_10] : memref<1x128xf32, #tpu.memory_space<vmem>>, vector<1x128xf32>
    %10 = vector.broadcast %9 : vector<1x128xf32> to vector<16x128xf32>
    %11 = arith.addf %8, %10 : vector<16x128xf32>
    %c0_11 = arith.constant 0 : index
    %c0_12 = arith.constant 0 : index
    %12 = vector.load %arg6[%c0_11, %c0_12] : memref<128x128xbf16, #tpu.memory_space<vmem>>, vector<128x128xbf16>
    %cst_13 = arith.constant dense<0.000000e+00> : vector<16x128xf32>
    %13 = tpu.matmul %1, %12, %cst_13 {dimension_numbers = #tpu.dot_dimension_numbers<[1], [0], [0], [1], [0, 0, 1, 1], [], []>} : vector<16x128xbf16>, vector<128x128xbf16>, vector<16x128xf32> -> vector<16x128xf32>
    %c0_14 = arith.constant 0 : index
    %c0_15 = arith.constant 0 : index
    %14 = vector.load %arg7[%c0_14, %c0_15] : memref<1x128xf32, #tpu.memory_space<vmem>>, vector<1x128xf32>
    %15 = vector.broadcast %14 : vector<1x128xf32> to vector<16x128xf32>
    %16 = arith.addf %13, %15 : vector<16x128xf32>
    %17 = vector.extract_strided_slice %6 {offsets = [0, 0], sizes = [16, 16], strides = [1, 1]} : vector<16x128xf32> to vector<16x16xf32>
    %18 = arith.truncf %17 : vector<16x16xf32> to vector<16x16xbf16>
    %19 = vector.extract_strided_slice %11 {offsets = [0, 0], sizes = [16, 16], strides = [1, 1]} : vector<16x128xf32> to vector<16x16xf32>
    %20 = arith.truncf %19 : vector<16x16xf32> to vector<16x16xbf16>
    %21 = vector.extract_strided_slice %16 {offsets = [0, 0], sizes = [16, 16], strides = [1, 1]} : vector<16x128xf32> to vector<16x16xf32>
    %22 = arith.truncf %21 : vector<16x16xf32> to vector<16x16xbf16>
    %cst_16 = arith.constant dense<0.000000e+00> : vector<16x16xf32>
    %23 = tpu.matmul %18, %20, %cst_16 {dimension_numbers = #tpu.dot_dimension_numbers<[1], [1], [0], [0], [0, 0, 1, 0], [], []>} : vector<16x16xbf16>, vector<16x16xbf16>, vector<16x16xf32> -> vector<16x16xf32>
    %cst_17 = arith.constant 2.500000e-01 : f32
    %24 = vector.broadcast %cst_17 : f32 to vector<16x16xf32>
    %25 = arith.mulf %23, %24 : vector<16x16xf32>
    %cst_18 = arith.constant dense<0xFF800000> : vector<16xf32>
    %26 = vector.multi_reduction <maximumf>, %25, %cst_18 [1] : vector<16x16xf32> to vector<16xf32>
    %27 = vector.shape_cast %26 : vector<16xf32> to vector<16x1xf32>
    %28 = vector.broadcast %27 : vector<16x1xf32> to vector<16x16xf32>
    %29 = arith.subf %25, %28 : vector<16x16xf32>
    %30 = math.exp %29 : vector<16x16xf32>
    %cst_19 = arith.constant dense<0.000000e+00> : vector<16xf32>
    %31 = vector.multi_reduction <add>, %30, %cst_19 [1] : vector<16x16xf32> to vector<16xf32>
    %32 = vector.shape_cast %31 : vector<16xf32> to vector<16x1xf32>
    %33 = tpu.reciprocal %32 {approx = true} : vector<16x1xf32> -> vector<16x1xf32>
    %34 = vector.broadcast %33 : vector<16x1xf32> to vector<16x16xf32>
    %35 = arith.mulf %30, %34 : vector<16x16xf32>
    %36 = arith.truncf %35 : vector<16x16xf32> to vector<16x16xbf16>
    %cst_20 = arith.constant dense<0.000000e+00> : vector<16x16xf32>
    %37 = tpu.matmul %36, %22, %cst_20 {dimension_numbers = #tpu.dot_dimension_numbers<[1], [0], [0], [1], [0, 0, 1, 1], [], []>} : vector<16x16xbf16>, vector<16x16xbf16>, vector<16x16xf32> -> vector<16x16xf32>
    %38 = vector.extract_strided_slice %6 {offsets = [0, 16], sizes = [16, 16], strides = [1, 1]} : vector<16x128xf32> to vector<16x16xf32>
    %39 = arith.truncf %38 : vector<16x16xf32> to vector<16x16xbf16>
    %40 = vector.extract_strided_slice %11 {offsets = [0, 16], sizes = [16, 16], strides = [1, 1]} : vector<16x128xf32> to vector<16x16xf32>
    %41 = arith.truncf %40 : vector<16x16xf32> to vector<16x16xbf16>
    %42 = vector.extract_strided_slice %16 {offsets = [0, 16], sizes = [16, 16], strides = [1, 1]} : vector<16x128xf32> to vector<16x16xf32>
    %43 = arith.truncf %42 : vector<16x16xf32> to vector<16x16xbf16>
    %cst_21 = arith.constant dense<0.000000e+00> : vector<16x16xf32>
    %44 = tpu.matmul %39, %41, %cst_21 {dimension_numbers = #tpu.dot_dimension_numbers<[1], [1], [0], [0], [0, 0, 1, 0], [], []>} : vector<16x16xbf16>, vector<16x16xbf16>, vector<16x16xf32> -> vector<16x16xf32>
    %cst_22 = arith.constant 2.500000e-01 : f32
    %45 = vector.broadcast %cst_22 : f32 to vector<16x16xf32>
    %46 = arith.mulf %44, %45 : vector<16x16xf32>
    %cst_23 = arith.constant dense<0xFF800000> : vector<16xf32>
    %47 = vector.multi_reduction <maximumf>, %46, %cst_23 [1] : vector<16x16xf32> to vector<16xf32>
    %48 = vector.shape_cast %47 : vector<16xf32> to vector<16x1xf32>
    %49 = vector.broadcast %48 : vector<16x1xf32> to vector<16x16xf32>
    %50 = arith.subf %46, %49 : vector<16x16xf32>
    %51 = math.exp %50 : vector<16x16xf32>
    %cst_24 = arith.constant dense<0.000000e+00> : vector<16xf32>
    %52 = vector.multi_reduction <add>, %51, %cst_24 [1] : vector<16x16xf32> to vector<16xf32>
    %53 = vector.shape_cast %52 : vector<16xf32> to vector<16x1xf32>
    %54 = tpu.reciprocal %53 {approx = true} : vector<16x1xf32> -> vector<16x1xf32>
    %55 = vector.broadcast %54 : vector<16x1xf32> to vector<16x16xf32>
    %56 = arith.mulf %51, %55 : vector<16x16xf32>
    %57 = arith.truncf %56 : vector<16x16xf32> to vector<16x16xbf16>
    %cst_25 = arith.constant dense<0.000000e+00> : vector<16x16xf32>
    %58 = tpu.matmul %57, %43, %cst_25 {dimension_numbers = #tpu.dot_dimension_numbers<[1], [0], [0], [1], [0, 0, 1, 1], [], []>} : vector<16x16xbf16>, vector<16x16xbf16>, vector<16x16xf32> -> vector<16x16xf32>
    %59 = vector.extract_strided_slice %6 {offsets = [0, 32], sizes = [16, 16], strides = [1, 1]} : vector<16x128xf32> to vector<16x16xf32>
    %60 = arith.truncf %59 : vector<16x16xf32> to vector<16x16xbf16>
    %61 = vector.extract_strided_slice %11 {offsets = [0, 32], sizes = [16, 16], strides = [1, 1]} : vector<16x128xf32> to vector<16x16xf32>
    %62 = arith.truncf %61 : vector<16x16xf32> to vector<16x16xbf16>
    %63 = vector.extract_strided_slice %16 {offsets = [0, 32], sizes = [16, 16], strides = [1, 1]} : vector<16x128xf32> to vector<16x16xf32>
    %64 = arith.truncf %63 : vector<16x16xf32> to vector<16x16xbf16>
    %cst_26 = arith.constant dense<0.000000e+00> : vector<16x16xf32>
    %65 = tpu.matmul %60, %62, %cst_26 {dimension_numbers = #tpu.dot_dimension_numbers<[1], [1], [0], [0], [0, 0, 1, 0], [], []>} : vector<16x16xbf16>, vector<16x16xbf16>, vector<16x16xf32> -> vector<16x16xf32>
    %cst_27 = arith.constant 2.500000e-01 : f32
    %66 = vector.broadcast %cst_27 : f32 to vector<16x16xf32>
    %67 = arith.mulf %65, %66 : vector<16x16xf32>
    %cst_28 = arith.constant dense<0xFF800000> : vector<16xf32>
    %68 = vector.multi_reduction <maximumf>, %67, %cst_28 [1] : vector<16x16xf32> to vector<16xf32>
    %69 = vector.shape_cast %68 : vector<16xf32> to vector<16x1xf32>
    %70 = vector.broadcast %69 : vector<16x1xf32> to vector<16x16xf32>
    %71 = arith.subf %67, %70 : vector<16x16xf32>
    %72 = math.exp %71 : vector<16x16xf32>
    %cst_29 = arith.constant dense<0.000000e+00> : vector<16xf32>
    %73 = vector.multi_reduction <add>, %72, %cst_29 [1] : vector<16x16xf32> to vector<16xf32>
    %74 = vector.shape_cast %73 : vector<16xf32> to vector<16x1xf32>
    %75 = tpu.reciprocal %74 {approx = true} : vector<16x1xf32> -> vector<16x1xf32>
    %76 = vector.broadcast %75 : vector<16x1xf32> to vector<16x16xf32>
    %77 = arith.mulf %72, %76 : vector<16x16xf32>
    %78 = arith.truncf %77 : vector<16x16xf32> to vector<16x16xbf16>
    %cst_30 = arith.constant dense<0.000000e+00> : vector<16x16xf32>
    %79 = tpu.matmul %78, %64, %cst_30 {dimension_numbers = #tpu.dot_dimension_numbers<[1], [0], [0], [1], [0, 0, 1, 1], [], []>} : vector<16x16xbf16>, vector<16x16xbf16>, vector<16x16xf32> -> vector<16x16xf32>
    %80 = vector.extract_strided_slice %6 {offsets = [0, 48], sizes = [16, 16], strides = [1, 1]} : vector<16x128xf32> to vector<16x16xf32>
    %81 = arith.truncf %80 : vector<16x16xf32> to vector<16x16xbf16>
    %82 = vector.extract_strided_slice %11 {offsets = [0, 48], sizes = [16, 16], strides = [1, 1]} : vector<16x128xf32> to vector<16x16xf32>
    %83 = arith.truncf %82 : vector<16x16xf32> to vector<16x16xbf16>
    %84 = vector.extract_strided_slice %16 {offsets = [0, 48], sizes = [16, 16], strides = [1, 1]} : vector<16x128xf32> to vector<16x16xf32>
    %85 = arith.truncf %84 : vector<16x16xf32> to vector<16x16xbf16>
    %cst_31 = arith.constant dense<0.000000e+00> : vector<16x16xf32>
    %86 = tpu.matmul %81, %83, %cst_31 {dimension_numbers = #tpu.dot_dimension_numbers<[1], [1], [0], [0], [0, 0, 1, 0], [], []>} : vector<16x16xbf16>, vector<16x16xbf16>, vector<16x16xf32> -> vector<16x16xf32>
    %cst_32 = arith.constant 2.500000e-01 : f32
    %87 = vector.broadcast %cst_32 : f32 to vector<16x16xf32>
    %88 = arith.mulf %86, %87 : vector<16x16xf32>
    %cst_33 = arith.constant dense<0xFF800000> : vector<16xf32>
    %89 = vector.multi_reduction <maximumf>, %88, %cst_33 [1] : vector<16x16xf32> to vector<16xf32>
    %90 = vector.shape_cast %89 : vector<16xf32> to vector<16x1xf32>
    %91 = vector.broadcast %90 : vector<16x1xf32> to vector<16x16xf32>
    %92 = arith.subf %88, %91 : vector<16x16xf32>
    %93 = math.exp %92 : vector<16x16xf32>
    %cst_34 = arith.constant dense<0.000000e+00> : vector<16xf32>
    %94 = vector.multi_reduction <add>, %93, %cst_34 [1] : vector<16x16xf32> to vector<16xf32>
    %95 = vector.shape_cast %94 : vector<16xf32> to vector<16x1xf32>
    %96 = tpu.reciprocal %95 {approx = true} : vector<16x1xf32> -> vector<16x1xf32>
    %97 = vector.broadcast %96 : vector<16x1xf32> to vector<16x16xf32>
    %98 = arith.mulf %93, %97 : vector<16x16xf32>
    %99 = arith.truncf %98 : vector<16x16xf32> to vector<16x16xbf16>
    %cst_35 = arith.constant dense<0.000000e+00> : vector<16x16xf32>
    %100 = tpu.matmul %99, %85, %cst_35 {dimension_numbers = #tpu.dot_dimension_numbers<[1], [0], [0], [1], [0, 0, 1, 1], [], []>} : vector<16x16xbf16>, vector<16x16xbf16>, vector<16x16xf32> -> vector<16x16xf32>
    %101 = vector.extract_strided_slice %6 {offsets = [0, 64], sizes = [16, 16], strides = [1, 1]} : vector<16x128xf32> to vector<16x16xf32>
    %102 = arith.truncf %101 : vector<16x16xf32> to vector<16x16xbf16>
    %103 = vector.extract_strided_slice %11 {offsets = [0, 64], sizes = [16, 16], strides = [1, 1]} : vector<16x128xf32> to vector<16x16xf32>
    %104 = arith.truncf %103 : vector<16x16xf32> to vector<16x16xbf16>
    %105 = vector.extract_strided_slice %16 {offsets = [0, 64], sizes = [16, 16], strides = [1, 1]} : vector<16x128xf32> to vector<16x16xf32>
    %106 = arith.truncf %105 : vector<16x16xf32> to vector<16x16xbf16>
    %cst_36 = arith.constant dense<0.000000e+00> : vector<16x16xf32>
    %107 = tpu.matmul %102, %104, %cst_36 {dimension_numbers = #tpu.dot_dimension_numbers<[1], [1], [0], [0], [0, 0, 1, 0], [], []>} : vector<16x16xbf16>, vector<16x16xbf16>, vector<16x16xf32> -> vector<16x16xf32>
    %cst_37 = arith.constant 2.500000e-01 : f32
    %108 = vector.broadcast %cst_37 : f32 to vector<16x16xf32>
    %109 = arith.mulf %107, %108 : vector<16x16xf32>
    %cst_38 = arith.constant dense<0xFF800000> : vector<16xf32>
    %110 = vector.multi_reduction <maximumf>, %109, %cst_38 [1] : vector<16x16xf32> to vector<16xf32>
    %111 = vector.shape_cast %110 : vector<16xf32> to vector<16x1xf32>
    %112 = vector.broadcast %111 : vector<16x1xf32> to vector<16x16xf32>
    %113 = arith.subf %109, %112 : vector<16x16xf32>
    %114 = math.exp %113 : vector<16x16xf32>
    %cst_39 = arith.constant dense<0.000000e+00> : vector<16xf32>
    %115 = vector.multi_reduction <add>, %114, %cst_39 [1] : vector<16x16xf32> to vector<16xf32>
    %116 = vector.shape_cast %115 : vector<16xf32> to vector<16x1xf32>
    %117 = tpu.reciprocal %116 {approx = true} : vector<16x1xf32> -> vector<16x1xf32>
    %118 = vector.broadcast %117 : vector<16x1xf32> to vector<16x16xf32>
    %119 = arith.mulf %114, %118 : vector<16x16xf32>
    %120 = arith.truncf %119 : vector<16x16xf32> to vector<16x16xbf16>
    %cst_40 = arith.constant dense<0.000000e+00> : vector<16x16xf32>
    %121 = tpu.matmul %120, %106, %cst_40 {dimension_numbers = #tpu.dot_dimension_numbers<[1], [0], [0], [1], [0, 0, 1, 1], [], []>} : vector<16x16xbf16>, vector<16x16xbf16>, vector<16x16xf32> -> vector<16x16xf32>
    %122 = vector.extract_strided_slice %6 {offsets = [0, 80], sizes = [16, 16], strides = [1, 1]} : vector<16x128xf32> to vector<16x16xf32>
    %123 = arith.truncf %122 : vector<16x16xf32> to vector<16x16xbf16>
    %124 = vector.extract_strided_slice %11 {offsets = [0, 80], sizes = [16, 16], strides = [1, 1]} : vector<16x128xf32> to vector<16x16xf32>
    %125 = arith.truncf %124 : vector<16x16xf32> to vector<16x16xbf16>
    %126 = vector.extract_strided_slice %16 {offsets = [0, 80], sizes = [16, 16], strides = [1, 1]} : vector<16x128xf32> to vector<16x16xf32>
    %127 = arith.truncf %126 : vector<16x16xf32> to vector<16x16xbf16>
    %cst_41 = arith.constant dense<0.000000e+00> : vector<16x16xf32>
    %128 = tpu.matmul %123, %125, %cst_41 {dimension_numbers = #tpu.dot_dimension_numbers<[1], [1], [0], [0], [0, 0, 1, 0], [], []>} : vector<16x16xbf16>, vector<16x16xbf16>, vector<16x16xf32> -> vector<16x16xf32>
    %cst_42 = arith.constant 2.500000e-01 : f32
    %129 = vector.broadcast %cst_42 : f32 to vector<16x16xf32>
    %130 = arith.mulf %128, %129 : vector<16x16xf32>
    %cst_43 = arith.constant dense<0xFF800000> : vector<16xf32>
    %131 = vector.multi_reduction <maximumf>, %130, %cst_43 [1] : vector<16x16xf32> to vector<16xf32>
    %132 = vector.shape_cast %131 : vector<16xf32> to vector<16x1xf32>
    %133 = vector.broadcast %132 : vector<16x1xf32> to vector<16x16xf32>
    %134 = arith.subf %130, %133 : vector<16x16xf32>
    %135 = math.exp %134 : vector<16x16xf32>
    %cst_44 = arith.constant dense<0.000000e+00> : vector<16xf32>
    %136 = vector.multi_reduction <add>, %135, %cst_44 [1] : vector<16x16xf32> to vector<16xf32>
    %137 = vector.shape_cast %136 : vector<16xf32> to vector<16x1xf32>
    %138 = tpu.reciprocal %137 {approx = true} : vector<16x1xf32> -> vector<16x1xf32>
    %139 = vector.broadcast %138 : vector<16x1xf32> to vector<16x16xf32>
    %140 = arith.mulf %135, %139 : vector<16x16xf32>
    %141 = arith.truncf %140 : vector<16x16xf32> to vector<16x16xbf16>
    %cst_45 = arith.constant dense<0.000000e+00> : vector<16x16xf32>
    %142 = tpu.matmul %141, %127, %cst_45 {dimension_numbers = #tpu.dot_dimension_numbers<[1], [0], [0], [1], [0, 0, 1, 1], [], []>} : vector<16x16xbf16>, vector<16x16xbf16>, vector<16x16xf32> -> vector<16x16xf32>
    %143 = vector.extract_strided_slice %6 {offsets = [0, 96], sizes = [16, 16], strides = [1, 1]} : vector<16x128xf32> to vector<16x16xf32>
    %144 = arith.truncf %143 : vector<16x16xf32> to vector<16x16xbf16>
    %145 = vector.extract_strided_slice %11 {offsets = [0, 96], sizes = [16, 16], strides = [1, 1]} : vector<16x128xf32> to vector<16x16xf32>
    %146 = arith.truncf %145 : vector<16x16xf32> to vector<16x16xbf16>
    %147 = vector.extract_strided_slice %16 {offsets = [0, 96], sizes = [16, 16], strides = [1, 1]} : vector<16x128xf32> to vector<16x16xf32>
    %148 = arith.truncf %147 : vector<16x16xf32> to vector<16x16xbf16>
    %cst_46 = arith.constant dense<0.000000e+00> : vector<16x16xf32>
    %149 = tpu.matmul %144, %146, %cst_46 {dimension_numbers = #tpu.dot_dimension_numbers<[1], [1], [0], [0], [0, 0, 1, 0], [], []>} : vector<16x16xbf16>, vector<16x16xbf16>, vector<16x16xf32> -> vector<16x16xf32>
    %cst_47 = arith.constant 2.500000e-01 : f32
    %150 = vector.broadcast %cst_47 : f32 to vector<16x16xf32>
    %151 = arith.mulf %149, %150 : vector<16x16xf32>
    %cst_48 = arith.constant dense<0xFF800000> : vector<16xf32>
    %152 = vector.multi_reduction <maximumf>, %151, %cst_48 [1] : vector<16x16xf32> to vector<16xf32>
    %153 = vector.shape_cast %152 : vector<16xf32> to vector<16x1xf32>
    %154 = vector.broadcast %153 : vector<16x1xf32> to vector<16x16xf32>
    %155 = arith.subf %151, %154 : vector<16x16xf32>
    %156 = math.exp %155 : vector<16x16xf32>
    %cst_49 = arith.constant dense<0.000000e+00> : vector<16xf32>
    %157 = vector.multi_reduction <add>, %156, %cst_49 [1] : vector<16x16xf32> to vector<16xf32>
    %158 = vector.shape_cast %157 : vector<16xf32> to vector<16x1xf32>
    %159 = tpu.reciprocal %158 {approx = true} : vector<16x1xf32> -> vector<16x1xf32>
    %160 = vector.broadcast %159 : vector<16x1xf32> to vector<16x16xf32>
    %161 = arith.mulf %156, %160 : vector<16x16xf32>
    %162 = arith.truncf %161 : vector<16x16xf32> to vector<16x16xbf16>
    %cst_50 = arith.constant dense<0.000000e+00> : vector<16x16xf32>
    %163 = tpu.matmul %162, %148, %cst_50 {dimension_numbers = #tpu.dot_dimension_numbers<[1], [0], [0], [1], [0, 0, 1, 1], [], []>} : vector<16x16xbf16>, vector<16x16xbf16>, vector<16x16xf32> -> vector<16x16xf32>
    %164 = vector.extract_strided_slice %6 {offsets = [0, 112], sizes = [16, 16], strides = [1, 1]} : vector<16x128xf32> to vector<16x16xf32>
    %165 = arith.truncf %164 : vector<16x16xf32> to vector<16x16xbf16>
    %166 = vector.extract_strided_slice %11 {offsets = [0, 112], sizes = [16, 16], strides = [1, 1]} : vector<16x128xf32> to vector<16x16xf32>
    %167 = arith.truncf %166 : vector<16x16xf32> to vector<16x16xbf16>
    %168 = vector.extract_strided_slice %16 {offsets = [0, 112], sizes = [16, 16], strides = [1, 1]} : vector<16x128xf32> to vector<16x16xf32>
    %169 = arith.truncf %168 : vector<16x16xf32> to vector<16x16xbf16>
    %cst_51 = arith.constant dense<0.000000e+00> : vector<16x16xf32>
    %170 = tpu.matmul %165, %167, %cst_51 {dimension_numbers = #tpu.dot_dimension_numbers<[1], [1], [0], [0], [0, 0, 1, 0], [], []>} : vector<16x16xbf16>, vector<16x16xbf16>, vector<16x16xf32> -> vector<16x16xf32>
    %cst_52 = arith.constant 2.500000e-01 : f32
    %171 = vector.broadcast %cst_52 : f32 to vector<16x16xf32>
    %172 = arith.mulf %170, %171 : vector<16x16xf32>
    %cst_53 = arith.constant dense<0xFF800000> : vector<16xf32>
    %173 = vector.multi_reduction <maximumf>, %172, %cst_53 [1] : vector<16x16xf32> to vector<16xf32>
    %174 = vector.shape_cast %173 : vector<16xf32> to vector<16x1xf32>
    %175 = vector.broadcast %174 : vector<16x1xf32> to vector<16x16xf32>
    %176 = arith.subf %172, %175 : vector<16x16xf32>
    %177 = math.exp %176 : vector<16x16xf32>
    %cst_54 = arith.constant dense<0.000000e+00> : vector<16xf32>
    %178 = vector.multi_reduction <add>, %177, %cst_54 [1] : vector<16x16xf32> to vector<16xf32>
    %179 = vector.shape_cast %178 : vector<16xf32> to vector<16x1xf32>
    %180 = tpu.reciprocal %179 {approx = true} : vector<16x1xf32> -> vector<16x1xf32>
    %181 = vector.broadcast %180 : vector<16x1xf32> to vector<16x16xf32>
    %182 = arith.mulf %177, %181 : vector<16x16xf32>
    %183 = arith.truncf %182 : vector<16x16xf32> to vector<16x16xbf16>
    %cst_55 = arith.constant dense<0.000000e+00> : vector<16x16xf32>
    %184 = tpu.matmul %183, %169, %cst_55 {dimension_numbers = #tpu.dot_dimension_numbers<[1], [0], [0], [1], [0, 0, 1, 1], [], []>} : vector<16x16xbf16>, vector<16x16xbf16>, vector<16x16xf32> -> vector<16x16xf32>
    %185 = tpu.concatenate %37, %58, %79, %100, %121, %142, %163, %184 in 1 : vector<16x16xf32>, vector<16x16xf32>, vector<16x16xf32>, vector<16x16xf32>, vector<16x16xf32>, vector<16x16xf32>, vector<16x16xf32>, vector<16x16xf32> -> vector<16x128xf32>
    %186 = arith.truncf %185 : vector<16x128xf32> to vector<16x128xbf16>
    %c0_56 = arith.constant 0 : index
    %c0_57 = arith.constant 0 : index
    %187 = vector.load %arg8[%c0_56, %c0_57] : memref<128x128xbf16, #tpu.memory_space<vmem>>, vector<128x128xbf16>
    %cst_58 = arith.constant dense<0.000000e+00> : vector<16x128xf32>
    %188 = tpu.matmul %186, %187, %cst_58 {dimension_numbers = #tpu.dot_dimension_numbers<[1], [0], [0], [1], [0, 0, 1, 1], [], []>} : vector<16x128xbf16>, vector<128x128xbf16>, vector<16x128xf32> -> vector<16x128xf32>
    %c0_59 = arith.constant 0 : index
    %c0_60 = arith.constant 0 : index
    %189 = vector.load %arg9[%c0_59, %c0_60] : memref<1x128xf32, #tpu.memory_space<vmem>>, vector<1x128xf32>
    %190 = vector.broadcast %189 : vector<1x128xf32> to vector<16x128xf32>
    %191 = arith.addf %188, %190 : vector<16x128xf32>
    %c0_61 = arith.constant 0 : index
    %c0_62 = arith.constant 0 : index
    %c0_63 = arith.constant 0 : index
    %192 = vector.load %arg10[%c0_61, %c0_62, %c0_63] : memref<1x16x128xf32, #tpu.memory_space<vmem>>, vector<1x16x128xf32>
    %193 = vector.shape_cast %192 : vector<1x16x128xf32> to vector<16x128xf32>
    %194 = vector.shape_cast %191 : vector<16x128xf32> to vector<1x16x128xf32>
    tpu.vector_store %arg10[%c0_61, %c0_62, %c0_63], %194 {strides = array<i32>} : memref<1x16x128xf32, #tpu.memory_space<vmem>>, vector<1x16x128xf32>,
    return
  }
  func.func @transform_0(%arg0: i32) -> (i32, i32, i32) {
    %c0_i32 = arith.constant 0 : i32
    %c0_i32_0 = arith.constant 0 : i32
    %c0_i32_1 = arith.constant 0 : i32
    return %arg0, %c0_i32, %c0_i32_0 : i32, i32, i32
  }
  func.func @transform_1(%arg0: i32) -> (i32, i32) {
    %c0_i32 = arith.constant 0 : i32
    %c0_i32_0 = arith.constant 0 : i32
    %c0_i32_1 = arith.constant 0 : i32
    return %c0_i32, %c0_i32_0 : i32, i32
  }
  func.func @transform_2(%arg0: i32) -> (i32, i32) {
    %c0_i32 = arith.constant 0 : i32
    %c0_i32_0 = arith.constant 0 : i32
    %c0_i32_1 = arith.constant 0 : i32
    return %c0_i32, %c0_i32_0 : i32, i32
  }
  func.func @transform_3(%arg0: i32) -> (i32, i32) {
    %c0_i32 = arith.constant 0 : i32
    %c0_i32_0 = arith.constant 0 : i32
    %c0_i32_1 = arith.constant 0 : i32
    return %c0_i32, %c0_i32_0 : i32, i32
  }
  func.func @transform_4(%arg0: i32) -> (i32, i32) {
    %c0_i32 = arith.constant 0 : i32
    %c0_i32_0 = arith.constant 0 : i32
    %c0_i32_1 = arith.constant 0 : i32
    return %c0_i32, %c0_i32_0 : i32, i32
  }
  func.func @transform_5(%arg0: i32) -> (i32, i32) {
    %c0_i32 = arith.constant 0 : i32
    %c0_i32_0 = arith.constant 0 : i32
    %c0_i32_1 = arith.constant 0 : i32
    return %c0_i32, %c0_i32_0 : i32, i32
  }
  func.func @transform_6(%arg0: i32) -> (i32, i32) {
    %c0_i32 = arith.constant 0 : i32
    %c0_i32_0 = arith.constant 0 : i32
    %c0_i32_1 = arith.constant 0 : i32
    return %c0_i32, %c0_i32_0 : i32, i32
  }
  func.func @transform_7(%arg0: i32) -> (i32, i32) {
    %c0_i32 = arith.constant 0 : i32
    %c0_i32_0 = arith.constant 0 : i32
    %c0_i32_1 = arith.constant 0 : i32
    return %c0_i32, %c0_i32_0 : i32, i32
  }
  func.func @transform_8(%arg0: i32) -> (i32, i32) {
    %c0_i32 = arith.constant 0 : i32
    %c0_i32_0 = arith.constant 0 : i32
    %c0_i32_1 = arith.constant 0 : i32
    return %c0_i32, %c0_i32_0 : i32, i32
  }
  func.func @transform_9(%arg0: i32) -> (i32, i32, i32) {
    %c0_i32 = arith.constant 0 : i32
    %c0_i32_0 = arith.constant 0 : i32
    %c0_i32_1 = arith.constant 0 : i32
    return %arg0, %c0_i32, %c0_i32_0 : i32, i32, i32
  }
}

</mosaic_0001>

<llo_original>
// kernel: tpu_custom_call.1
$region0: #{tpu_custom_call.1}
  #allocation0 [shape = 'u32[]', space=smem, size = 0x4, offset = 0x4, fixed_abs, tag = 'smem constant byte address 0x4 - core index']
  #allocation1 [shape = 'u32[144,128]{1,0:T(1,128)}', space=vmem, size = 0x12000, scoped, tag = 'internal scratch']
  %s0 = inlined_call_operand.hbm [shape: bf16[2,16,128], index: 0, kind: input, shape index: {}]
  %s1 = inlined_call_operand.hbm [shape: bf16[128,128], index: 1, kind: input, shape index: {}]
  %s2 = inlined_call_operand.vmem [shape: f32[1,128], index: 2, kind: input, shape index: {}]
  %s3 = inlined_call_operand.hbm [shape: bf16[128,128], index: 3, kind: input, shape index: {}]
  %s4 = inlined_call_operand.vmem [shape: f32[1,128], index: 4, kind: input, shape index: {}]
  %s5 = inlined_call_operand.hbm [shape: bf16[128,128], index: 5, kind: input, shape index: {}]
  %s6 = inlined_call_operand.vmem [shape: f32[1,128], index: 6, kind: input, shape index: {}]
  %s7 = inlined_call_operand.hbm [shape: bf16[128,128], index: 7, kind: input, shape index: {}]
  %s8 = inlined_call_operand.vmem [shape: f32[1,128], index: 8, kind: input, shape index: {}]
  %s9 = inlined_call_operand.hbm [shape: f32[2,16,128], index: 9, kind: output, shape index: {}]
  %s10 = sld [smem:[#allocation0]]
  $region89: #{tpu_custom_call.1} parent=0
    _
  %s12 = ssub.s32 1, %s10
  %s13 = scalar_select 0, %s12, %s10
  $region1: #{tpu_custom_call.1} parent=0
    #allocation2 [shape = 'u8[8192]{0}', space=vmem, size = 0x2000, scoped, tag = 'input window, operand 0']
    #allocation3 [shape = 's32[2]{0}', space=sflag, size = 0x8, scoped, tag = 'scoped memory for tpu_custom_call.1']
    #allocation4 [shape = 's32[2]{0}', space=sflag, size = 0x8, scoped, tag = 'scoped memory for tpu_custom_call.1']
    #allocation5 [shape = 'u8[32768]{0}', space=vmem, size = 0x8000, scoped, tag = 'input window, operand 1, single buffered']
    #allocation6 [shape = 's32[1]{0}', space=sflag, size = 0x4, scoped, tag = 'scoped memory for tpu_custom_call.1']
    #allocation7 [shape = 'u8[32768]{0}', space=vmem, size = 0x8000, scoped, tag = 'input window, operand 3, single buffered']
    #allocation8 [shape = 'u8[32768]{0}', space=vmem, size = 0x8000, scoped, tag = 'input window, operand 5, single buffered']
    #allocation9 [shape = 's32[1]{0}', space=sflag, size = 0x4, scoped, tag = 'scoped memory for tpu_custom_call.1']
    #allocation10 [shape = 'u8[32768]{0}', space=vmem, size = 0x8000, scoped, tag = 'input window, operand 7, single buffered']
    #allocation11 [shape = 'u8[16384]{0}', space=vmem, size = 0x4000, scoped, tag = 'output window, operand 0']
    %14 = vsyncpa [#allocation3], 0
    %s15 = scalar_lea.sflag [#allocation3], 1
    %16 = vsyncpa %s15, 0
    %17 = vsyncpa [#allocation6], 0
    %18 = vsyncpa [#allocation9], 0
    %19 = vsyncpa [#allocation4], 0
    %s20 = scalar_lea.sflag [#allocation4], 1
    %21 = vsyncpa %s20, 0
    loop: start=0, step=1, limit=4
    $region2: #{tpu_custom_call.1} parent=1 // loop_pre_header
      _
    $region3: #{tpu_custom_call.1} parent=1 // loop_header
      %s23 = sphi 0, %s27
      %p24 = scmp.ge.s32.totalorder %s23, 4
      %s33 = sphi 0, %s35
      %s36 = sphi 0, %s33
      %s37 = sphi 0, %s36
      %s53 = sphi 0, %s37
      %s57 = sphi 0, %s57
      %s59 = sphi 0, %s57
      %s60 = sphi 0, %s59
      %s74 = sphi 0, %s60
      %s78 = sphi 0, %s78
      %s80 = sphi 0, %s78
      %s81 = sphi 0, %s80
      %s95 = sphi 0, %s81
      %s99 = sphi 0, %s99
      %s101 = sphi 0, %s99
      %s102 = sphi 0, %s101
      %s116 = sphi 0, %s102
      %s120 = sphi 0, %s120
      %s122 = sphi 0, %s120
      %s123 = sphi 0, %s122
      %s137 = sphi 0, %s123
      %s141 = sphi 0, %s141
      %s143 = sphi 0, %s141
      %s144 = sphi 0, %s143
      %s158 = sphi 0, %s144
      %s162 = sphi 0, %s162
      %s164 = sphi 0, %s162
      %s165 = sphi 0, %s164
      %s179 = sphi 0, %s165
      %s183 = sphi 0, %s183
      %s185 = sphi 0, %s183
      %s186 = sphi 0, %s185
      %s200 = sphi 0, %s186
      %s204 = sphi 0, %s204
      %s206 = sphi 0, %s204
      %s207 = sphi 0, %s206
      %s221 = sphi 0, %s207
      %s227 = sphi 0, %s229
      %s230 = sphi 0, %s227
      %s231 = sphi 0, %s230
      %s247 = sphi 0, %s231
    $region4: #{tpu_custom_call.1} parent=1 // loop_header_branch
      %26 = sbr.rel (%p24) target = $region8
    $region5: #{tpu_custom_call.1} parent=1 // loop_body
      %s28 = ssub.s32 %s23, 1
      %s29 = ssub.s32 %s23, 2
      %s30 = sadd.s32 %s23, 1
      %s31 = ssub.s32 %s23, %s30
      %p32 = scmp.eq.s32.totalorder %s31, 0
      %s34 = sadd.s32 %s33, 1
      %s35 = scalar_select %p32, %s33, %s34
      %p38 = pneg %p32
      %p39 = scmp.eq.s32.totalorder %s23, 1
      %p40 = por %p38, %p39
      %p41 = scmp.ne.s32.totalorder %s33, %s36
      %p42 = scmp.eq.s32.totalorder %s23, 0
      %p43 = por %p41, %p42
      %p44 = scmp.ne.s32.totalorder %s33, %s36
      %p45 = scmp.eq.s32.totalorder %s28, 1
      %p46 = por %p44, %p45
      %p47 = scmp.ne.s32.totalorder %s36, %s37
      %p48 = scmp.eq.s32.totalorder %s28, 0
      %p49 = por %p47, %p48
      %p50 = scmp.ne.s32.totalorder %s36, %s37
      %p51 = scmp.eq.s32.totalorder %s29, 1
      %p52 = por %p50, %p51
      %p54 = scmp.ne.s32.totalorder %s37, %s53
      %p55 = scmp.eq.s32.totalorder %s29, 0
      %p56 = por %p54, %p55
      %s58 = sadd.s32 %s57, 1
      %p61 = scmp.eq.s32.totalorder %s23, 1
      %p62 = scmp.ne.s32.totalorder %s57, %s59
      %p63 = scmp.eq.s32.totalorder %s23, 0
      %p64 = por %p62, %p63
      %p65 = scmp.ne.s32.totalorder %s57, %s59
      %p66 = scmp.eq.s32.totalorder %s28, 1
      %p67 = por %p65, %p66
      %p68 = scmp.ne.s32.totalorder %s59, %s60
      %p69 = scmp.eq.s32.totalorder %s28, 0
      %p70 = por %p68, %p69
      %p71 = scmp.ne.s32.totalorder %s59, %s60
      %p72 = scmp.eq.s32.totalorder %s29, 1
      %p73 = por %p71, %p72
      %p75 = scmp.ne.s32.totalorder %s60, %s74
      %p76 = scmp.eq.s32.totalorder %s29, 0
      %p77 = por %p75, %p76
      %s79 = sadd.s32 %s78, 1
      %p82 = scmp.eq.s32.totalorder %s23, 1
      %p83 = scmp.ne.s32.totalorder %s78, %s80
      %p84 = scmp.eq.s32.totalorder %s23, 0
      %p85 = por %p83, %p84
      %p86 = scmp.ne.s32.totalorder %s78, %s80
      %p87 = scmp.eq.s32.totalorder %s28, 1
      %p88 = por %p86, %p87
      %p89 = scmp.ne.s32.totalorder %s80, %s81
      %p90 = scmp.eq.s32.totalorder %s28, 0
      %p91 = por %p89, %p90
      %p92 = scmp.ne.s32.totalorder %s80, %s81
      %p93 = scmp.eq.s32.totalorder %s29, 1
      %p94 = por %p92, %p93
      %p96 = scmp.ne.s32.totalorder %s81, %s95
      %p97 = scmp.eq.s32.totalorder %s29, 0
      %p98 = por %p96, %p97
      %s100 = sadd.s32 %s99, 1
      %p103 = scmp.eq.s32.totalorder %s23, 1
      %p104 = scmp.ne.s32.totalorder %s99, %s101
      %p105 = scmp.eq.s32.totalorder %s23, 0
      %p106 = por %p104, %p105
      %p107 = scmp.ne.s32.totalorder %s99, %s101
      %p108 = scmp.eq.s32.totalorder %s28, 1
      %p109 = por %p107, %p108
      %p110 = scmp.ne.s32.totalorder %s101, %s102
      %p111 = scmp.eq.s32.totalorder %s28, 0
      %p112 = por %p110, %p111
      %p113 = scmp.ne.s32.totalorder %s101, %s102
      %p114 = scmp.eq.s32.totalorder %s29, 1
      %p115 = por %p113, %p114
      %p117 = scmp.ne.s32.totalorder %s102, %s116
      %p118 = scmp.eq.s32.totalorder %s29, 0
      %p119 = por %p117, %p118
      %s121 = sadd.s32 %s120, 1
      %p124 = scmp.eq.s32.totalorder %s23, 1
      %p125 = scmp.ne.s32.totalorder %s120, %s122
      %p126 = scmp.eq.s32.totalorder %s23, 0
      %p127 = por %p125, %p126
      %p128 = scmp.ne.s32.totalorder %s120, %s122
      %p129 = scmp.eq.s32.totalorder %s28, 1
      %p130 = por %p128, %p129
      %p131 = scmp.ne.s32.totalorder %s122, %s123
      %p132 = scmp.eq.s32.totalorder %s28, 0
      %p133 = por %p131, %p132
      %p134 = scmp.ne.s32.totalorder %s122, %s123
      %p135 = scmp.eq.s32.totalorder %s29, 1
      %p136 = por %p134, %p135
      %p138 = scmp.ne.s32.totalorder %s123, %s137
      %p139 = scmp.eq.s32.totalorder %s29, 0
      %p140 = por %p138, %p139
      %s142 = sadd.s32 %s141, 1
      %p145 = scmp.eq.s32.totalorder %s23, 1
      %p146 = scmp.ne.s32.totalorder %s141, %s143
      %p147 = scmp.eq.s32.totalorder %s23, 0
      %p148 = por %p146, %p147
      %p149 = scmp.ne.s32.totalorder %s141, %s143
      %p150 = scmp.eq.s32.totalorder %s28, 1
      %p151 = por %p149, %p150
      %p152 = scmp.ne.s32.totalorder %s143, %s144
      %p153 = scmp.eq.s32.totalorder %s28, 0
      %p154 = por %p152, %p153
      %p155 = scmp.ne.s32.totalorder %s143, %s144
      %p156 = scmp.eq.s32.totalorder %s29, 1
      %p157 = por %p155, %p156
      %p159 = scmp.ne.s32.totalorder %s144, %s158
      %p160 = scmp.eq.s32.totalorder %s29, 0
      %p161 = por %p159, %p160
      %s163 = sadd.s32 %s162, 1
      %p166 = scmp.eq.s32.totalorder %s23, 1
      %p167 = scmp.ne.s32.totalorder %s162, %s164
      %p168 = scmp.eq.s32.totalorder %s23, 0
      %p169 = por %p167, %p168
      %p170 = scmp.ne.s32.totalorder %s162, %s164
      %p171 = scmp.eq.s32.totalorder %s28, 1
      %p172 = por %p170, %p171
      %p173 = scmp.ne.s32.totalorder %s164, %s165
      %p174 = scmp.eq.s32.totalorder %s28, 0
      %p175 = por %p173, %p174
      %p176 = scmp.ne.s32.totalorder %s164, %s165
      %p177 = scmp.eq.s32.totalorder %s29, 1
      %p178 = por %p176, %p177
      %p180 = scmp.ne.s32.totalorder %s165, %s179
      %p181 = scmp.eq.s32.totalorder %s29, 0
      %p182 = por %p180, %p181
      %s184 = sadd.s32 %s183, 1
      %p187 = scmp.eq.s32.totalorder %s23, 1
      %p188 = scmp.ne.s32.totalorder %s183, %s185
      %p189 = scmp.eq.s32.totalorder %s23, 0
      %p190 = por %p188, %p189
      %p191 = scmp.ne.s32.totalorder %s183, %s185
      %p192 = scmp.eq.s32.totalorder %s28, 1
      %p193 = por %p191, %p192
      %p194 = scmp.ne.s32.totalorder %s185, %s186
      %p195 = scmp.eq.s32.totalorder %s28, 0
      %p196 = por %p194, %p195
      %p197 = scmp.ne.s32.totalorder %s185, %s186
      %p198 = scmp.eq.s32.totalorder %s29, 1
      %p199 = por %p197, %p198
      %p201 = scmp.ne.s32.totalorder %s186, %s200
      %p202 = scmp.eq.s32.totalorder %s29, 0
      %p203 = por %p201, %p202
      %s205 = sadd.s32 %s204, 1
      %p208 = scmp.eq.s32.totalorder %s23, 1
      %p209 = scmp.ne.s32.totalorder %s204, %s206
      %p210 = scmp.eq.s32.totalorder %s23, 0
      %p211 = por %p209, %p210
      %p212 = scmp.ne.s32.totalorder %s204, %s206
      %p213 = scmp.eq.s32.totalorder %s28, 1
      %p214 = por %p212, %p213
      %p215 = scmp.ne.s32.totalorder %s206, %s207
      %p216 = scmp.eq.s32.totalorder %s28, 0
      %p217 = por %p215, %p216
      %p218 = scmp.ne.s32.totalorder %s206, %s207
      %p219 = scmp.eq.s32.totalorder %s29, 1
      %p220 = por %p218, %p219
      %p222 = scmp.ne.s32.totalorder %s207, %s221
      %p223 = scmp.eq.s32.totalorder %s29, 0
      %p224 = por %p222, %p223
      %s225 = ssub.s32 %s23, %s30
      %p226 = scmp.eq.s32.totalorder %s225, 0
      %s228 = sadd.s32 %s227, 1
      %s229 = scalar_select %p226, %s227, %s228
      %p232 = pneg %p226
      %p233 = scmp.eq.s32.totalorder %s23, 1
      %p234 = por %p232, %p233
      %p235 = scmp.ne.s32.totalorder %s227, %s230
      %p236 = scmp.eq.s32.totalorder %s23, 0
      %p237 = por %p235, %p236
      %p238 = scmp.ne.s32.totalorder %s227, %s230
      %p239 = scmp.eq.s32.totalorder %s28, 1
      %p240 = por %p238, %p239
      %p241 = scmp.ne.s32.totalorder %s230, %s231
      %p242 = scmp.eq.s32.totalorder %s28, 0
      %p243 = por %p241, %p242
      %p244 = scmp.ne.s32.totalorder %s230, %s231
      %p245 = scmp.eq.s32.totalorder %s29, 1
      %p246 = por %p244, %p245
      %p248 = scmp.ne.s32.totalorder %s231, %s247
      %p249 = scmp.eq.s32.totalorder %s29, 0
      %p250 = por %p248, %p249
      %p251 = scmp.le.s32.totalorder 1, %s23
      %p252 = scmp.lt.s32.totalorder %s23, 3
      %p253 = pnand %p251, %p252
      %p254 = pneg %p253
      // Predicated region
      $region9: #{tpu_custom_call.1} parent=5 // pred_check
        _
      $region10: #{tpu_custom_call.1} parent=5 // pred_check_branch
        %256 = sbr.rel (%p253) target = $region12
      $region11: #{tpu_custom_call.1} parent=5 // pred_region
        %s257 = ssub.s32 %s23, 1
        // Predicated region
        $region13: #{tpu_custom_call.1} parent=11 // pred_check
          %p258 = pneg %p70
        $region14: #{tpu_custom_call.1} parent=11 // pred_check_branch
          %260 = sbr.rel (%p258) target = $region16
        $region15: #{tpu_custom_call.1} parent=11 // pred_region
          %s262 = ssub.s32 1024, 1024
          %263 = vsyncadd [#allocation6], %s262
          %s264 = sshll.u32 [#allocation5], 4
          %s265 = int_to_ptr.vmem [resolvable:$true] %s264
          %270 = dma.hbm_to_vmem [thread:$0]  %s1, 1024, %s265, [#allocation6], 64, 64, 4
        $region16: #{tpu_custom_call.1} parent=11 // pred_fallthru
          _
        // Predicated region
        $region17: #{tpu_custom_call.1} parent=11 // pred_check
          %p271 = pneg %p91
        $region18: #{tpu_custom_call.1} parent=11 // pred_check_branch
          %273 = sbr.rel (%p271) target = $region20
        $region19: #{tpu_custom_call.1} parent=11 // pred_region
          _
        $region20: #{tpu_custom_call.1} parent=11 // pred_fallthru
          _
        // Predicated region
        $region21: #{tpu_custom_call.1} parent=11 // pred_check
          %p274 = pneg %p112
        $region22: #{tpu_custom_call.1} parent=11 // pred_check_branch
          %276 = sbr.rel (%p274) target = $region24
        $region23: #{tpu_custom_call.1} parent=11 // pred_region
          %s278 = ssub.s32 1024, 1024
          %279 = vsyncadd [#allocation6], %s278
          %s280 = sshll.u32 [#allocation7], 4
          %s281 = int_to_ptr.vmem [resolvable:$true] %s280
          %286 = dma.hbm_to_vmem [thread:$0]  %s3, 1024, %s281, [#allocation6], 64, 64, 4
        $region24: #{tpu_custom_call.1} parent=11 // pred_fallthru
          _
        // Predicated region
        $region25: #{tpu_custom_call.1} parent=11 // pred_check
          %p287 = pneg %p133
        $region26: #{tpu_custom_call.1} parent=11 // pred_check_branch
          %289 = sbr.rel (%p287) target = $region28
        $region27: #{tpu_custom_call.1} parent=11 // pred_region
          _
        $region28: #{tpu_custom_call.1} parent=11 // pred_fallthru
          _
        // Predicated region
        $region29: #{tpu_custom_call.1} parent=11 // pred_check
          %p290 = pneg %p154
        $region30: #{tpu_custom_call.1} parent=11 // pred_check_branch
          %292 = sbr.rel (%p290) target = $region32
        $region31: #{tpu_custom_call.1} parent=11 // pred_region
          %s294 = ssub.s32 1024, 1024
          %295 = vsyncadd [#allocation9], %s294
          %s296 = sshll.u32 [#allocation8], 4
          %s297 = int_to_ptr.vmem [resolvable:$true] %s296
          %302 = dma.hbm_to_vmem [thread:$0]  %s5, 1024, %s297, [#allocation9], 64, 64, 4
        $region32: #{tpu_custom_call.1} parent=11 // pred_fallthru
          _
        // Predicated region
        $region33: #{tpu_custom_call.1} parent=11 // pred_check
          %p303 = pneg %p175
        $region34: #{tpu_custom_call.1} parent=11 // pred_check_branch
          %305 = sbr.rel (%p303) target = $region36
        $region35: #{tpu_custom_call.1} parent=11 // pred_region
          _
        $region36: #{tpu_custom_call.1} parent=11 // pred_fallthru
          _
        // Predicated region
        $region37: #{tpu_custom_call.1} parent=11 // pred_check
          %p306 = pneg %p196
        $region38: #{tpu_custom_call.1} parent=11 // pred_check_branch
          %308 = sbr.rel (%p306) target = $region40
        $region39: #{tpu_custom_call.1} parent=11 // pred_region
          %s310 = ssub.s32 1024, 1024
          %311 = vsyncadd [#allocation9], %s310
          %s312 = sshll.u32 [#allocation10], 4
          %s313 = int_to_ptr.vmem [resolvable:$true] %s312
          %318 = dma.hbm_to_vmem [thread:$0]  %s7, 1024, %s313, [#allocation9], 64, 64, 4
        $region40: #{tpu_custom_call.1} parent=11 // pred_fallthru
          _
        // Predicated region
        $region41: #{tpu_custom_call.1} parent=11 // pred_check
          %p319 = pneg %p217
        $region42: #{tpu_custom_call.1} parent=11 // pred_check_branch
          %321 = sbr.rel (%p319) target = $region44
        $region43: #{tpu_custom_call.1} parent=11 // pred_region
          _
        $region44: #{tpu_custom_call.1} parent=11 // pred_fallthru
          _
      $region12: #{tpu_custom_call.1} parent=5 // pred_fallthru
        _
      %p322 = scmp.lt.s32.totalorder %s23, 2
      // Predicated region
      $region45: #{tpu_custom_call.1} parent=5 // pred_check
        %p323 = pneg %p322
      $region46: #{tpu_custom_call.1} parent=5 // pred_check_branch
        %325 = sbr.rel (%p323) target = $region48
      $region47: #{tpu_custom_call.1} parent=5 // pred_region
        // Predicated region
        $region49: #{tpu_custom_call.1} parent=47 // pred_check
          %p326 = pneg %p43
        $region50: #{tpu_custom_call.1} parent=47 // pred_check_branch
          %328 = sbr.rel (%p326) target = $region52
        $region51: #{tpu_custom_call.1} parent=47 // pred_region
          %s329 = sand.u32 %s33, 1
          %s330 = scalar_lea.sflag [#allocation3], %s329
          %s331 = sand.u32 %s33, 1
          %s332 = smul.addr %s331, 8
          %s333 = scalar_lea.vmem [#allocation2], %s332
          %s335 = ssub.s32 128, 128
          %336 = vsyncadd %s330, %s335
          %s337 = smul.addr %s23, 2
          %s338 = smul.addr %s337, 64
          %s339 = scalar_lea.hbm %s0, %s338
          %s340 = sshll.u32 %s333, 4
          %s341 = int_to_ptr.vmem [resolvable:$true] %s340
          %346 = dma.hbm_to_vmem [thread:$0]  %s339, 128, %s341, %s330, 64, 64, 4
        $region52: #{tpu_custom_call.1} parent=47 // pred_fallthru
          _
      $region48: #{tpu_custom_call.1} parent=5 // pred_fallthru
        _
      %p347 = scmp.le.s32.totalorder 1, %s23
      %p348 = scmp.lt.s32.totalorder %s23, 3
      %p349 = pnand %p347, %p348
      %p350 = pneg %p349
      // Predicated region
      $region53: #{tpu_custom_call.1} parent=5 // pred_check
        _
      $region54: #{tpu_custom_call.1} parent=5 // pred_check_branch
        %352 = sbr.rel (%p349) target = $region56
      $region55: #{tpu_custom_call.1} parent=5 // pred_region
        %s353 = ssub.s32 %s23, 1
        %s354 = sand.u32 %s36, 1
        %s355 = scalar_lea.sflag [#allocation3], %s354
        %s356 = sand.u32 %s36, 1
        %s357 = smul.addr %s356, 8
        %s358 = scalar_lea.vmem [#allocation2], %s357
        // Predicated region
        $region57: #{tpu_custom_call.1} parent=55 // pred_check
          %p359 = pneg %p49
        $region58: #{tpu_custom_call.1} parent=55 // pred_check_branch
          %361 = sbr.rel (%p359) target = $region60
        $region59: #{tpu_custom_call.1} parent=55 // pred_region
          %362 = dma.done %s355, 128
        $region60: #{tpu_custom_call.1} parent=55 // pred_fallthru
          _
        // Predicated region
        $region61: #{tpu_custom_call.1} parent=55 // pred_check
          %p363 = pneg %p70
        $region62: #{tpu_custom_call.1} parent=55 // pred_check_branch
          %365 = sbr.rel (%p363) target = $region64
        $region63: #{tpu_custom_call.1} parent=55 // pred_region
          %366 = dma.done [#allocation6], 1024
        $region64: #{tpu_custom_call.1} parent=55 // pred_fallthru
          _
        // Predicated region
        $region65: #{tpu_custom_call.1} parent=55 // pred_check
          %p367 = pneg %p112
        $region66: #{tpu_custom_call.1} parent=55 // pred_check_branch
          %369 = sbr.rel (%p367) target = $region68
        $region67: #{tpu_custom_call.1} parent=55 // pred_region
          %370 = dma.done [#allocation6], 1024
        $region68: #{tpu_custom_call.1} parent=55 // pred_fallthru
          _
        // Predicated region
        $region69: #{tpu_custom_call.1} parent=55 // pred_check
          %p371 = pneg %p154
        $region70: #{tpu_custom_call.1} parent=55 // pred_check_branch
          %373 = sbr.rel (%p371) target = $region72
        $region71: #{tpu_custom_call.1} parent=55 // pred_region
          %374 = dma.done [#allocation9], 1024
        $region72: #{tpu_custom_call.1} parent=55 // pred_fallthru
          _
        // Predicated region
        $region73: #{tpu_custom_call.1} parent=55 // pred_check
          %p375 = pneg %p196
        $region74: #{tpu_custom_call.1} parent=55 // pred_check_branch
          %377 = sbr.rel (%p375) target = $region76
        $region75: #{tpu_custom_call.1} parent=55 // pred_region
          %378 = dma.done [#allocation9], 1024
        $region76: #{tpu_custom_call.1} parent=55 // pred_fallthru
          _
        %s379 = sand.u32 %s36, 1
        %s380 = scalar_lea.sflag [#allocation3], %s379
        %s381 = sand.u32 %s36, 1
        %s382 = smul.addr %s381, 8
        %s383 = scalar_lea.vmem [#allocation2], %s382
        %p384 = pneg %p49
        %p385 = pneg %p46
        %p386 = pneg %p70
        %p387 = pneg %p67
        %p388 = pneg %p91
        %p389 = pneg %p88
        %p390 = pneg %p112
        %p391 = pneg %p109
        %p392 = pneg %p133
        %p393 = pneg %p130
        %p394 = pneg %p154
        %p395 = pneg %p151
        %p396 = pneg %p175
        %p397 = pneg %p172
        %p398 = pneg %p196
        %p399 = pneg %p193
        %p400 = pneg %p217
        %p401 = pneg %p214
        %p402 = pneg %p243
        %p403 = pneg %p240
        %s404 = sand.u32 %s230, 1
        %s405 = scalar_lea.sflag [#allocation4], %s404
        %s406 = sand.u32 %s230, 1
        %s407 = smul.addr %s406, 16
        %s408 = scalar_lea.vmem [#allocation11], %s407
        %v410 = vld [vmem:[%s358] sm:$0xf]
        %v411 = vld [vmem:[%s358 + $0x4] sm:$0xf]
        %v412 = vld [vmem:[#allocation5] sm:$0xf]
        %v413 = vld [vmem:[#allocation5 + $0x4] sm:$0xf]
        %v414 = vld [vmem:[#allocation5 + $0x8] sm:$0xf]
        %v415 = vld [vmem:[#allocation5 + $0xc] sm:$0xf]
        %v416 = vld [vmem:[#allocation5 + $0x10] sm:$0xf]
        %v417 = vld [vmem:[#allocation5 + $0x14] sm:$0xf]
        %v418 = vld [vmem:[#allocation5 + $0x18] sm:$0xf]
        %v419 = vld [vmem:[#allocation5 + $0x1c] sm:$0xf]
        %v420 = vld [vmem:[#allocation5 + $0x20] sm:$0xf]
        %v421 = vld [vmem:[#allocation5 + $0x24] sm:$0xf]
        %v422 = vld [vmem:[#allocation5 + $0x28] sm:$0xf]
        %v423 = vld [vmem:[#allocation5 + $0x2c] sm:$0xf]
        %v424 = vld [vmem:[#allocation5 + $0x30] sm:$0xf]
        %v425 = vld [vmem:[#allocation5 + $0x34] sm:$0xf]
        %v426 = vld [vmem:[#allocation5 + $0x38] sm:$0xf]
        %v427 = vld [vmem:[#allocation5 + $0x3c] sm:$0xf]
        %v428 = vld [vmem:[%s2] sm:$0x1]
        %v430 = vlaneseq
        %v431 = vshrl.u32 %v430, 7
        %v432 = vsub.s32 0, %v431
        %v433 = vrot.slane %v428, %v432
        %v437 = vunpack.c.l.b16 %v410
        %v438 = vunpack.c.l.b16 %v411
        %v439 = vpack.c.b16 %v438, %v437
        %v457 = vunpack.c.l.b16 %v412
        %v458 = vunpack.c.l.b16 %v413
        %v459 = vunpack.c.l.b16 %v414
        %v460 = vunpack.c.l.b16 %v415
        %v461 = vunpack.c.l.b16 %v416
        %v462 = vunpack.c.l.b16 %v417
        %v463 = vunpack.c.l.b16 %v418
        %v464 = vunpack.c.l.b16 %v419
        %v465 = vunpack.c.l.b16 %v420
        %v466 = vunpack.c.l.b16 %v421
        %v467 = vunpack.c.l.b16 %v422
        %v468 = vunpack.c.l.b16 %v423
        %v469 = vunpack.c.l.b16 %v424
        %v470 = vunpack.c.l.b16 %v425
        %v471 = vunpack.c.l.b16 %v426
        %v472 = vunpack.c.l.b16 %v427
        %v473 = vpack.c.b16 %v458, %v457
        %v474 = vpack.c.b16 %v460, %v459
        %v475 = vpack.c.b16 %v462, %v461
        %v476 = vpack.c.b16 %v464, %v463
        %v477 = vpack.c.b16 %v466, %v465
        %v478 = vpack.c.b16 %v468, %v467
        %v479 = vpack.c.b16 %v470, %v469
        %v480 = vpack.c.b16 %v472, %v471
        %489 = vmatprep.subr.bf16.mxu0 0
        %490 = vmatpush1.bf16.msra.mxu0 %v473
        %491 = vmatprep.subr.bf16.mxu0 0
        %492 = vmatpush1.bf16.msra.mxu0 %v474
        %493 = vmatprep.subr.bf16.mxu0 0
        %494 = vmatpush1.bf16.msra.mxu0 %v475
        %495 = vmatprep.subr.bf16.mxu0 0
        %496 = vmatpush1.bf16.msra.mxu0 %v476
        %497 = vmatprep.subr.bf16.mxu0 0
        %498 = vmatpush1.bf16.msra.mxu0 %v477
        %499 = vmatprep.subr.bf16.mxu0 0
        %500 = vmatpush1.bf16.msra.mxu0 %v478
        %501 = vmatprep.subr.bf16.mxu0 0
        %502 = vmatpush1.bf16.msra.mxu0 %v479
        %503 = vmatprep.subr.bf16.mxu0 0
        %504 = vmatpush1.bf16.msra.mxu0 %v480
        %505 = vmatprep.subr.bf16.mxu0 0
        %506 = vmatpush1.bf16.msra.mxu0 0
        %507 = vmatprep.subr.bf16.mxu0 0
        %508 = vmatpush1.bf16.msra.mxu0 0
        %509 = vmatprep.subr.bf16.mxu0 0
        %510 = vmatpush1.bf16.msra.mxu0 0
        %511 = vmatprep.subr.bf16.mxu0 0
        %512 = vmatpush1.bf16.msra.mxu0 0
        %513 = vmatprep.subr.bf16.mxu0 0
        %514 = vmatpush1.bf16.msra.mxu0 0
        %515 = vmatprep.subr.bf16.mxu0 0
        %516 = vmatpush1.bf16.msra.mxu0 0
        %517 = vmatprep.subr.bf16.mxu0 0
        %518 = vmatpush1.bf16.msra.mxu0 0
        %519 = vmatprep.subr.bf16.mxu0 0
        %520 = vmatpush1.bf16.msra.mxu0 0
        %521 = vmatprep.mubr.bf16.mxu0 0
        %522 = vmatmul.mubr.bf16.gmra.mrb[0].mxu0 %v439
        %v523 = vpop.f32.mrb[0].mxu0
        %v524 = vadd.f32 %v433, %v523
        %v525 = vpop.f32.mrb[0].mxu0
        %v526 = vpop.f32.mrb[0].mxu0
        %v527 = vadd.f32 %v433, %v526
        %v528 = vpop.f32.mrb[0].mxu0
        %529 = vdwg.mxu0
        %v530 = vld [vmem:[#allocation7] sm:$0xf]
        %v531 = vld [vmem:[#allocation7 + $0x4] sm:$0xf]
        %v532 = vld [vmem:[#allocation7 + $0x8] sm:$0xf]
        %v533 = vld [vmem:[#allocation7 + $0xc] sm:$0xf]
        %v534 = vld [vmem:[#allocation7 + $0x10] sm:$0xf]
        %v535 = vld [vmem:[#allocation7 + $0x14] sm:$0xf]
        %v536 = vld [vmem:[#allocation7 + $0x18] sm:$0xf]
        %v537 = vld [vmem:[#allocation7 + $0x1c] sm:$0xf]
        %v538 = vld [vmem:[#allocation7 + $0x20] sm:$0xf]
        %v539 = vld [vmem:[#allocation7 + $0x24] sm:$0xf]
        %v540 = vld [vmem:[#allocation7 + $0x28] sm:$0xf]
        %v541 = vld [vmem:[#allocation7 + $0x2c] sm:$0xf]
        %v542 = vld [vmem:[#allocation7 + $0x30] sm:$0xf]
        %v543 = vld [vmem:[#allocation7 + $0x34] sm:$0xf]
        %v544 = vld [vmem:[#allocation7 + $0x38] sm:$0xf]
        %v545 = vld [vmem:[#allocation7 + $0x3c] sm:$0xf]
        %v546 = vld [vmem:[%s4] sm:$0x1]
        %v548 = vlaneseq
        %v549 = vshrl.u32 %v548, 7
        %v550 = vsub.s32 0, %v549
        %v551 = vrot.slane %v546, %v550
        %v569 = vunpack.c.l.b16 %v530
        %v570 = vunpack.c.l.b16 %v531
        %v571 = vunpack.c.l.b16 %v532
        %v572 = vunpack.c.l.b16 %v533
        %v573 = vunpack.c.l.b16 %v534
        %v574 = vunpack.c.l.b16 %v535
        %v575 = vunpack.c.l.b16 %v536
        %v576 = vunpack.c.l.b16 %v537
        %v577 = vunpack.c.l.b16 %v538
        %v578 = vunpack.c.l.b16 %v539
        %v579 = vunpack.c.l.b16 %v540
        %v580 = vunpack.c.l.b16 %v541
        %v581 = vunpack.c.l.b16 %v542
        %v582 = vunpack.c.l.b16 %v543
        %v583 = vunpack.c.l.b16 %v544
        %v584 = vunpack.c.l.b16 %v545
        %v585 = vpack.c.b16 %v570, %v569
        %v586 = vpack.c.b16 %v572, %v571
        %v587 = vpack.c.b16 %v574, %v573
        %v588 = vpack.c.b16 %v576, %v575
        %v589 = vpack.c.b16 %v578, %v577
        %v590 = vpack.c.b16 %v580, %v579
        %v591 = vpack.c.b16 %v582, %v581
        %v592 = vpack.c.b16 %v584, %v583
        %601 = vmatprep.subr.bf16.mxu0 0
        %602 = vmatpush1.bf16.msra.mxu0 %v585
        %603 = vmatprep.subr.bf16.mxu0 0
        %604 = vmatpush1.bf16.msra.mxu0 %v586
        %605 = vmatprep.subr.bf16.mxu0 0
        %606 = vmatpush1.bf16.msra.mxu0 %v587
        %607 = vmatprep.subr.bf16.mxu0 0
        %608 = vmatpush1.bf16.msra.mxu0 %v588
        %609 = vmatprep.subr.bf16.mxu0 0
        %610 = vmatpush1.bf16.msra.mxu0 %v589
        %611 = vmatprep.subr.bf16.mxu0 0
        %612 = vmatpush1.bf16.msra.mxu0 %v590
        %613 = vmatprep.subr.bf16.mxu0 0
        %614 = vmatpush1.bf16.msra.mxu0 %v591
        %615 = vmatprep.subr.bf16.mxu0 0
        %616 = vmatpush1.bf16.msra.mxu0 %v592
        %617 = vmatprep.subr.bf16.mxu0 0
        %618 = vmatpush1.bf16.msra.mxu0 0
        %619 = vmatprep.subr.bf16.mxu0 0
        %620 = vmatpush1.bf16.msra.mxu0 0
        %621 = vmatprep.subr.bf16.mxu0 0
        %622 = vmatpush1.bf16.msra.mxu0 0
        %623 = vmatprep.subr.bf16.mxu0 0
        %624 = vmatpush1.bf16.msra.mxu0 0
        %625 = vmatprep.subr.bf16.mxu0 0
        %626 = vmatpush1.bf16.msra.mxu0 0
        %627 = vmatprep.subr.bf16.mxu0 0
        %628 = vmatpush1.bf16.msra.mxu0 0
        %629 = vmatprep.subr.bf16.mxu0 0
        %630 = vmatpush1.bf16.msra.mxu0 0
        %631 = vmatprep.subr.bf16.mxu0 0
        %632 = vmatpush1.bf16.msra.mxu0 0
        %633 = vmatprep.mubr.bf16.mxu0 0
        %634 = vmatmul.mubr.bf16.gmra.mrb[0].mxu0 %v439
        %v635 = vpop.f32.mrb[0].mxu0
        %v636 = vadd.f32 %v551, %v635
        %v637 = vpop.f32.mrb[0].mxu0
        %v638 = vpop.f32.mrb[0].mxu0
        %v639 = vadd.f32 %v551, %v638
        %v640 = vpop.f32.mrb[0].mxu0
        %641 = vdwg.mxu0
        %v642 = vld [vmem:[#allocation8] sm:$0xf]
        %v643 = vld [vmem:[#allocation8 + $0x4] sm:$0xf]
        %v644 = vld [vmem:[#allocation8 + $0x8] sm:$0xf]
        %v645 = vld [vmem:[#allocation8 + $0xc] sm:$0xf]
        %v646 = vld [vmem:[#allocation8 + $0x10] sm:$0xf]
        %v647 = vld [vmem:[#allocation8 + $0x14] sm:$0xf]
        %v648 = vld [vmem:[#allocation8 + $0x18] sm:$0xf]
        %v649 = vld [vmem:[#allocation8 + $0x1c] sm:$0xf]
        %v650 = vld [vmem:[#allocation8 + $0x20] sm:$0xf]
        %v651 = vld [vmem:[#allocation8 + $0x24] sm:$0xf]
        %v652 = vld [vmem:[#allocation8 + $0x28] sm:$0xf]
        %v653 = vld [vmem:[#allocation8 + $0x2c] sm:$0xf]
        %v654 = vld [vmem:[#allocation8 + $0x30] sm:$0xf]
        %v655 = vld [vmem:[#allocation8 + $0x34] sm:$0xf]
        %v656 = vld [vmem:[#allocation8 + $0x38] sm:$0xf]
        %v657 = vld [vmem:[#allocation8 + $0x3c] sm:$0xf]
        %v658 = vld [vmem:[%s6] sm:$0x1]
        %v660 = vlaneseq
        %v661 = vshrl.u32 %v660, 7
        %v662 = vsub.s32 0, %v661
        %v663 = vrot.slane %v658, %v662
        %v681 = vunpack.c.l.b16 %v642
        %v682 = vunpack.c.l.b16 %v643
        %v683 = vunpack.c.l.b16 %v644
        %v684 = vunpack.c.l.b16 %v645
        %v685 = vunpack.c.l.b16 %v646
        %v686 = vunpack.c.l.b16 %v647
        %v687 = vunpack.c.l.b16 %v648
        %v688 = vunpack.c.l.b16 %v649
        %v689 = vunpack.c.l.b16 %v650
        %v690 = vunpack.c.l.b16 %v651
        %v691 = vunpack.c.l.b16 %v652
        %v692 = vunpack.c.l.b16 %v653
        %v693 = vunpack.c.l.b16 %v654
        %v694 = vunpack.c.l.b16 %v655
        %v695 = vunpack.c.l.b16 %v656
        %v696 = vunpack.c.l.b16 %v657
        %v697 = vpack.c.b16 %v682, %v681
        %v698 = vpack.c.b16 %v684, %v683
        %v699 = vpack.c.b16 %v686, %v685
        %v700 = vpack.c.b16 %v688, %v687
        %v701 = vpack.c.b16 %v690, %v689
        %v702 = vpack.c.b16 %v692, %v691
        %v703 = vpack.c.b16 %v694, %v693
        %v704 = vpack.c.b16 %v696, %v695
        %713 = vmatprep.subr.bf16.mxu0 0
        %714 = vmatpush1.bf16.msra.mxu0 %v697
        %715 = vmatprep.subr.bf16.mxu0 0
        %716 = vmatpush1.bf16.msra.mxu0 %v698
        %717 = vmatprep.subr.bf16.mxu0 0
        %718 = vmatpush1.bf16.msra.mxu0 %v699
        %719 = vmatprep.subr.bf16.mxu0 0
        %720 = vmatpush1.bf16.msra.mxu0 %v700
        %721 = vmatprep.subr.bf16.mxu0 0
        %722 = vmatpush1.bf16.msra.mxu0 %v701
        %723 = vmatprep.subr.bf16.mxu0 0
        %724 = vmatpush1.bf16.msra.mxu0 %v702
        %725 = vmatprep.subr.bf16.mxu0 0
        %726 = vmatpush1.bf16.msra.mxu0 %v703
        %727 = vmatprep.subr.bf16.mxu0 0
        %728 = vmatpush1.bf16.msra.mxu0 %v704
        %729 = vmatprep.subr.bf16.mxu0 0
        %730 = vmatpush1.bf16.msra.mxu0 0
        %731 = vmatprep.subr.bf16.mxu0 0
        %732 = vmatpush1.bf16.msra.mxu0 0
        %733 = vmatprep.subr.bf16.mxu0 0
        %734 = vmatpush1.bf16.msra.mxu0 0
        %735 = vmatprep.subr.bf16.mxu0 0
        %736 = vmatpush1.bf16.msra.mxu0 0
        %737 = vmatprep.subr.bf16.mxu0 0
        %738 = vmatpush1.bf16.msra.mxu0 0
        %739 = vmatprep.subr.bf16.mxu0 0
        %740 = vmatpush1.bf16.msra.mxu0 0
        %741 = vmatprep.subr.bf16.mxu0 0
        %742 = vmatpush1.bf16.msra.mxu0 0
        %743 = vmatprep.subr.bf16.mxu0 0
        %744 = vmatpush1.bf16.msra.mxu0 0
        %745 = vmatprep.mubr.bf16.mxu0 0
        %746 = vmatmul.mubr.bf16.gmra.mrb[0].mxu0 %v439
        %v747 = vpop.f32.mrb[0].mxu0
        %v748 = vadd.f32 %v663, %v747
        %v749 = vpop.f32.mrb[0].mxu0
        %v750 = vpop.f32.mrb[0].mxu0
        %v751 = vadd.f32 %v663, %v750
        %v752 = vpop.f32.mrb[0].mxu0
        %753 = vdwg.mxu0
        %v754 = vpack.c.bf16 %v527, %v524
        %v755 = vpack.c.bf16 %v639, %v636
        %v756 = vpack.c.bf16 %v751, %v748
        %vm757 = vcmask 130048
        %v759 = vsel %vm757, %v754, 0
        %v762 = vsel %vm757, %v755, 0
        %764 = vmatprep.subr.bf16.mxu0 0
        %765 = vmatpush1.bf16.xpose.msra.mxu0 %v762
        %766 = vmatprep.subr.bf16.mxu0 0
        %767 = vmatpush1.bf16.xpose.msra.mxu0 0
        %768 = vmatprep.subr.bf16.mxu0 0
        %769 = vmatpush1.bf16.xpose.msra.mxu0 0
        %770 = vmatprep.subr.bf16.mxu0 0
        %771 = vmatpush1.bf16.xpose.msra.mxu0 0
        %772 = vmatprep.subr.bf16.mxu0 0
        %773 = vmatpush1.bf16.xpose.msra.mxu0 0
        %774 = vmatprep.subr.bf16.mxu0 0
        %775 = vmatpush1.bf16.xpose.msra.mxu0 0
        %776 = vmatprep.subr.bf16.mxu0 0
        %777 = vmatpush1.bf16.xpose.msra.mxu0 0
        %778 = vmatprep.subr.bf16.mxu0 0
        %779 = vmatpush1.bf16.xpose.msra.mxu0 0
        %780 = vmatprep.subr.bf16.mxu0 0
        %781 = vmatpush1.bf16.xpose.msra.mxu0 0
        %782 = vmatprep.subr.bf16.mxu0 0
        %783 = vmatpush1.bf16.xpose.msra.mxu0 0
        %784 = vmatprep.subr.bf16.mxu0 0
        %785 = vmatpush1.bf16.xpose.msra.mxu0 0
        %786 = vmatprep.subr.bf16.mxu0 0
        %787 = vmatpush1.bf16.xpose.msra.mxu0 0
        %788 = vmatprep.subr.bf16.mxu0 0
        %789 = vmatpush1.bf16.xpose.msra.mxu0 0
        %790 = vmatprep.subr.bf16.mxu0 0
        %791 = vmatpush1.bf16.xpose.msra.mxu0 0
        %792 = vmatprep.subr.bf16.mxu0 0
        %793 = vmatpush1.bf16.xpose.msra.mxu0 0
        %794 = vmatprep.subr.bf16.mxu0 0
        %795 = vmatpush1.bf16.xpose.msra.mxu0 0
        %796 = vmatprep.mubr.bf16.mxu0 0
        %797 = vmatmul.mubr.bf16.gmra.mrb[0].mxu0 %v759
        %v798 = vpop.f32.mrb[0].mxu0
        %v799 = vadd.f32 0.0, %v798
        %v800 = vpop.f32.mrb[0].mxu0
        %v801 = vpop.f32.mrb[0].mxu0
        %v802 = vadd.f32 0.0, %v801
        %v803 = vpop.f32.mrb[0].mxu0
        %804 = vdwg.mxu0
        %v805 = vmul.f32 %v799, 0.25
        %v806 = vmul.f32 %v802, 0.25
        %v807 = vsel %vm757, %v805, -inf
        %808 = vmax.xlane.f32.xlu0 %v807
        %v809 = vpop.xlane.xlu0 %808
        %v810 = vsel %vm757, %v806, -inf
        %811 = vmax.xlane.f32.xlu0 %v810
        %v812 = vpop.xlane.xlu0 %811
        %v813 = vsub.f32 %v805, %v809
        %v814 = vsub.f32 %v806, %v812
        %v815 = vmul.f32 %v813, 1.442695
        %v816 = vpow.pop %v815
        %v817 = vmul.f32 %v814, 1.442695
        %v818 = vpow.pop %v817
        %v819 = vsel %vm757, %v816, 0.0
        %820 = vadd.xlane.f32.xlu0 %v819
        %v821 = vpop.xlane.xlu0 %820
        %v822 = vsel %vm757, %v818, 0.0
        %823 = vadd.xlane.f32.xlu0 %v822
        %v824 = vpop.xlane.xlu0 %823
        %v825 = vrcp.pop %v821
        %v826 = vrcp.pop %v824
        %v827 = vmul.f32 %v816, %v825
        %v828 = vmul.f32 %v818, %v826
        %v829 = vpack.c.bf16 %v828, %v827
        %v831 = vsel %vm757, %v829, 0
        %833 = vmatprep.subr.bf16.mxu0 0
        %834 = vmatpush1.bf16.msra.mxu0 %v756
        %835 = vmatprep.subr.bf16.mxu0 0
        %836 = vmatpush1.bf16.msra.mxu0 0
        %837 = vmatprep.subr.bf16.mxu0 0
        %838 = vmatpush1.bf16.msra.mxu0 0
        %839 = vmatprep.subr.bf16.mxu0 0
        %840 = vmatpush1.bf16.msra.mxu0 0
        %841 = vmatprep.subr.bf16.mxu0 0
        %842 = vmatpush1.bf16.msra.mxu0 0
        %843 = vmatprep.subr.bf16.mxu0 0
        %844 = vmatpush1.bf16.msra.mxu0 0
        %845 = vmatprep.subr.bf16.mxu0 0
        %846 = vmatpush1.bf16.msra.mxu0 0
        %847 = vmatprep.subr.bf16.mxu0 0
        %848 = vmatpush1.bf16.msra.mxu0 0
        %849 = vmatprep.subr.bf16.mxu0 0
        %850 = vmatpush1.bf16.msra.mxu0 0
        %851 = vmatprep.subr.bf16.mxu0 0
        %852 = vmatpush1.bf16.msra.mxu0 0
        %853 = vmatprep.subr.bf16.mxu0 0
        %854 = vmatpush1.bf16.msra.mxu0 0
        %855 = vmatprep.subr.bf16.mxu0 0
        %856 = vmatpush1.bf16.msra.mxu0 0
        %857 = vmatprep.subr.bf16.mxu0 0
        %858 = vmatpush1.bf16.msra.mxu0 0
        %859 = vmatprep.subr.bf16.mxu0 0
        %860 = vmatpush1.bf16.msra.mxu0 0
        %861 = vmatprep.subr.bf16.mxu0 0
        %862 = vmatpush1.bf16.msra.mxu0 0
        %863 = vmatprep.subr.bf16.mxu0 0
        %864 = vmatpush1.bf16.msra.mxu0 0
        %865 = vmatprep.mubr.bf16.mxu0 0
        %866 = vmatmul.mubr.bf16.gmra.mrb[0].mxu0 %v831
        %v867 = vpop.f32.mrb[0].mxu0
        %v868 = vadd.f32 0.0, %v867
        %v869 = vpop.f32.mrb[0].mxu0
        %v870 = vpop.f32.mrb[0].mxu0
        %v871 = vadd.f32 0.0, %v870
        %v872 = vpop.f32.mrb[0].mxu0
        %873 = vdwg.mxu0
        %875 = vrot.lane.b32.xlu0 %v754, 112
        %v876 = vpop.permute.xlu0 %875
        %878 = vrot.lane.b32.xlu0 %v755, 112
        %v879 = vpop.permute.xlu0 %878
        %v881 = vsel %vm757, %v876, 0
        %v884 = vsel %vm757, %v879, 0
        %886 = vmatprep.subr.bf16.mxu0 0
        %887 = vmatpush1.bf16.xpose.msra.mxu0 %v884
        %888 = vmatprep.subr.bf16.mxu0 0
        %889 = vmatpush1.bf16.xpose.msra.mxu0 0
        %890 = vmatprep.subr.bf16.mxu0 0
        %891 = vmatpush1.bf16.xpose.msra.mxu0 0
        %892 = vmatprep.subr.bf16.mxu0 0
        %893 = vmatpush1.bf16.xpose.msra.mxu0 0
        %894 = vmatprep.subr.bf16.mxu0 0
        %895 = vmatpush1.bf16.xpose.msra.mxu0 0
        %896 = vmatprep.subr.bf16.mxu0 0
        %897 = vmatpush1.bf16.xpose.msra.mxu0 0
        %898 = vmatprep.subr.bf16.mxu0 0
        %899 = vmatpush1.bf16.xpose.msra.mxu0 0
        %900 = vmatprep.subr.bf16.mxu0 0
        %901 = vmatpush1.bf16.xpose.msra.mxu0 0
        %902 = vmatprep.subr.bf16.mxu0 0
        %903 = vmatpush1.bf16.xpose.msra.mxu0 0
        %904 = vmatprep.subr.bf16.mxu0 0
        %905 = vmatpush1.bf16.xpose.msra.mxu0 0
        %906 = vmatprep.subr.bf16.mxu0 0
        %907 = vmatpush1.bf16.xpose.msra.mxu0 0
        %908 = vmatprep.subr.bf16.mxu0 0
        %909 = vmatpush1.bf16.xpose.msra.mxu0 0
        %910 = vmatprep.subr.bf16.mxu0 0
        %911 = vmatpush1.bf16.xpose.msra.mxu0 0
        %912 = vmatprep.subr.bf16.mxu0 0
        %913 = vmatpush1.bf16.xpose.msra.mxu0 0
        %914 = vmatprep.subr.bf16.mxu0 0
        %915 = vmatpush1.bf16.xpose.msra.mxu0 0
        %916 = vmatprep.subr.bf16.mxu0 0
        %917 = vmatpush1.bf16.xpose.msra.mxu0 0
        %918 = vmatprep.mubr.bf16.mxu0 0
        %919 = vmatmul.mubr.bf16.gmra.mrb[0].mxu0 %v881
        %v920 = vpop.f32.mrb[0].mxu0
        %v921 = vadd.f32 0.0, %v920
        %v922 = vpop.f32.mrb[0].mxu0
        %v923 = vpop.f32.mrb[0].mxu0
        %v924 = vadd.f32 0.0, %v923
        %v925 = vpop.f32.mrb[0].mxu0
        %926 = vdwg.mxu0
        %v927 = vmul.f32 %v921, 0.25
        %v928 = vmul.f32 %v924, 0.25
        %v929 = vsel %vm757, %v927, -inf
        %930 = vmax.xlane.f32.xlu0 %v929
        %v931 = vpop.xlane.xlu0 %930
        %v932 = vsel %vm757, %v928, -inf
        %933 = vmax.xlane.f32.xlu0 %v932
        %v934 = vpop.xlane.xlu0 %933
        %v935 = vsub.f32 %v927, %v931
        %v936 = vsub.f32 %v928, %v934
        %v937 = vmul.f32 %v935, 1.442695
        %v938 = vpow.pop %v937
        %v939 = vmul.f32 %v936, 1.442695
        %v940 = vpow.pop %v939
        %v941 = vsel %vm757, %v938, 0.0
        %942 = vadd.xlane.f32.xlu0 %v941
        %v943 = vpop.xlane.xlu0 %942
        %v944 = vsel %vm757, %v940, 0.0
        %945 = vadd.xlane.f32.xlu0 %v944
        %v946 = vpop.xlane.xlu0 %945
        %v947 = vrcp.pop %v943
        %v948 = vrcp.pop %v946
        %v949 = vmul.f32 %v938, %v947
        %v950 = vmul.f32 %v940, %v948
        %v951 = vpack.c.bf16 %v950, %v949
        %953 = vrot.lane.b32.xlu0 %v756, 112
        %v954 = vpop.permute.xlu0 %953
        %v957 = vsel %vm757, %v951, 0
        %959 = vmatprep.subr.bf16.mxu0 0
        %960 = vmatpush1.bf16.msra.mxu0 %v954
        %961 = vmatprep.subr.bf16.mxu0 0
        %962 = vmatpush1.bf16.msra.mxu0 0
        %963 = vmatprep.subr.bf16.mxu0 0
        %964 = vmatpush1.bf16.msra.mxu0 0
        %965 = vmatprep.subr.bf16.mxu0 0
        %966 = vmatpush1.bf16.msra.mxu0 0
        %967 = vmatprep.subr.bf16.mxu0 0
        %968 = vmatpush1.bf16.msra.mxu0 0
        %969 = vmatprep.subr.bf16.mxu0 0
        %970 = vmatpush1.bf16.msra.mxu0 0
        %971 = vmatprep.subr.bf16.mxu0 0
        %972 = vmatpush1.bf16.msra.mxu0 0
        %973 = vmatprep.subr.bf16.mxu0 0
        %974 = vmatpush1.bf16.msra.mxu0 0
        %975 = vmatprep.subr.bf16.mxu0 0
        %976 = vmatpush1.bf16.msra.mxu0 0
        %977 = vmatprep.subr.bf16.mxu0 0
        %978 = vmatpush1.bf16.msra.mxu0 0
        %979 = vmatprep.subr.bf16.mxu0 0
        %980 = vmatpush1.bf16.msra.mxu0 0
        %981 = vmatprep.subr.bf16.mxu0 0
        %982 = vmatpush1.bf16.msra.mxu0 0
        %983 = vmatprep.subr.bf16.mxu0 0
        %984 = vmatpush1.bf16.msra.mxu0 0
        %985 = vmatprep.subr.bf16.mxu0 0
        %986 = vmatpush1.bf16.msra.mxu0 0
        %987 = vmatprep.subr.bf16.mxu0 0
        %988 = vmatpush1.bf16.msra.mxu0 0
        %989 = vmatprep.subr.bf16.mxu0 0
        %990 = vmatpush1.bf16.msra.mxu0 0
        %991 = vmatprep.mubr.bf16.mxu0 0
        %992 = vmatmul.mubr.bf16.gmra.mrb[0].mxu0 %v957
        %v993 = vpop.f32.mrb[0].mxu0
        %v994 = vadd.f32 0.0, %v993
        %v995 = vpop.f32.mrb[0].mxu0
        %v996 = vpop.f32.mrb[0].mxu0
        %v997 = vadd.f32 0.0, %v996
        %v998 = vpop.f32.mrb[0].mxu0
        %999 = vdwg.mxu0
        %1000 = vrot.lane.b32.xlu0 %v754, 96
        %v1001 = vpop.permute.xlu0 %1000
        %1002 = vrot.lane.b32.xlu0 %v755, 96
        %v1003 = vpop.permute.xlu0 %1002
        %v1005 = vsel %vm757, %v1001, 0
        %v1008 = vsel %vm757, %v1003, 0
        %1010 = vmatprep.subr.bf16.mxu0 0
        %1011 = vmatpush1.bf16.xpose.msra.mxu0 %v1008
        %1012 = vmatprep.subr.bf16.mxu0 0
        %1013 = vmatpush1.bf16.xpose.msra.mxu0 0
        %1014 = vmatprep.subr.bf16.mxu0 0
        %1015 = vmatpush1.bf16.xpose.msra.mxu0 0
        %1016 = vmatprep.subr.bf16.mxu0 0
        %1017 = vmatpush1.bf16.xpose.msra.mxu0 0
        %1018 = vmatprep.subr.bf16.mxu0 0
        %1019 = vmatpush1.bf16.xpose.msra.mxu0 0
        %1020 = vmatprep.subr.bf16.mxu0 0
        %1021 = vmatpush1.bf16.xpose.msra.mxu0 0
        %1022 = vmatprep.subr.bf16.mxu0 0
        %1023 = vmatpush1.bf16.xpose.msra.mxu0 0
        %1024 = vmatprep.subr.bf16.mxu0 0
        %1025 = vmatpush1.bf16.xpose.msra.mxu0 0
        %1026 = vmatprep.subr.bf16.mxu0 0
        %1027 = vmatpush1.bf16.xpose.msra.mxu0 0
        %1028 = vmatprep.subr.bf16.mxu0 0
        %1029 = vmatpush1.bf16.xpose.msra.mxu0 0
        %1030 = vmatprep.subr.bf16.mxu0 0
        %1031 = vmatpush1.bf16.xpose.msra.mxu0 0
        %1032 = vmatprep.subr.bf16.mxu0 0
        %1033 = vmatpush1.bf16.xpose.msra.mxu0 0
        %1034 = vmatprep.subr.bf16.mxu0 0
        %1035 = vmatpush1.bf16.xpose.msra.mxu0 0
        %1036 = vmatprep.subr.bf16.mxu0 0
        %1037 = vmatpush1.bf16.xpose.msra.mxu0 0
        %1038 = vmatprep.subr.bf16.mxu0 0
        %1039 = vmatpush1.bf16.xpose.msra.mxu0 0
        %1040 = vmatprep.subr.bf16.mxu0 0
        %1041 = vmatpush1.bf16.xpose.msra.mxu0 0
        %1042 = vmatprep.mubr.bf16.mxu0 0
        %1043 = vmatmul.mubr.bf16.gmra.mrb[0].mxu0 %v1005
        %v1044 = vpop.f32.mrb[0].mxu0
        %v1045 = vadd.f32 0.0, %v1044
        %v1046 = vpop.f32.mrb[0].mxu0
        %v1047 = vpop.f32.mrb[0].mxu0
        %v1048 = vadd.f32 0.0, %v1047
        %v1049 = vpop.f32.mrb[0].mxu0
        %1050 = vdwg.mxu0
        %v1051 = vmul.f32 %v1045, 0.25
        %v1052 = vmul.f32 %v1048, 0.25
        %v1053 = vsel %vm757, %v1051, -inf
        %1054 = vmax.xlane.f32.xlu0 %v1053
        %v1055 = vpop.xlane.xlu0 %1054
        %v1056 = vsel %vm757, %v1052, -inf
        %1057 = vmax.xlane.f32.xlu0 %v1056
        %v1058 = vpop.xlane.xlu0 %1057
        %v1059 = vsub.f32 %v1051, %v1055
        %v1060 = vsub.f32 %v1052, %v1058
        %v1061 = vmul.f32 %v1059, 1.442695
        %v1062 = vpow.pop %v1061
        %v1063 = vmul.f32 %v1060, 1.442695
        %v1064 = vpow.pop %v1063
        %v1065 = vsel %vm757, %v1062, 0.0
        %1066 = vadd.xlane.f32.xlu0 %v1065
        %v1067 = vpop.xlane.xlu0 %1066
        %v1068 = vsel %vm757, %v1064, 0.0
        %1069 = vadd.xlane.f32.xlu0 %v1068
        %v1070 = vpop.xlane.xlu0 %1069
        %v1071 = vrcp.pop %v1067
        %v1072 = vrcp.pop %v1070
        %v1073 = vmul.f32 %v1062, %v1071
        %v1074 = vmul.f32 %v1064, %v1072
        %v1075 = vpack.c.bf16 %v1074, %v1073
        %1076 = vrot.lane.b32.xlu0 %v756, 96
        %v1077 = vpop.permute.xlu0 %1076
        %v1080 = vsel %vm757, %v1075, 0
        %1082 = vmatprep.subr.bf16.mxu0 0
        %1083 = vmatpush1.bf16.msra.mxu0 %v1077
        %1084 = vmatprep.subr.bf16.mxu0 0
        %1085 = vmatpush1.bf16.msra.mxu0 0
        %1086 = vmatprep.subr.bf16.mxu0 0
        %1087 = vmatpush1.bf16.msra.mxu0 0
        %1088 = vmatprep.subr.bf16.mxu0 0
        %1089 = vmatpush1.bf16.msra.mxu0 0
        %1090 = vmatprep.subr.bf16.mxu0 0
        %1091 = vmatpush1.bf16.msra.mxu0 0
        %1092 = vmatprep.subr.bf16.mxu0 0
        %1093 = vmatpush1.bf16.msra.mxu0 0
        %1094 = vmatprep.subr.bf16.mxu0 0
        %1095 = vmatpush1.bf16.msra.mxu0 0
        %1096 = vmatprep.subr.bf16.mxu0 0
        %1097 = vmatpush1.bf16.msra.mxu0 0
        %1098 = vmatprep.subr.bf16.mxu0 0
        %1099 = vmatpush1.bf16.msra.mxu0 0
        %1100 = vmatprep.subr.bf16.mxu0 0
        %1101 = vmatpush1.bf16.msra.mxu0 0
        %1102 = vmatprep.subr.bf16.mxu0 0
        %1103 = vmatpush1.bf16.msra.mxu0 0
        %1104 = vmatprep.subr.bf16.mxu0 0
        %1105 = vmatpush1.bf16.msra.mxu0 0
        %1106 = vmatprep.subr.bf16.mxu0 0
        %1107 = vmatpush1.bf16.msra.mxu0 0
        %1108 = vmatprep.subr.bf16.mxu0 0
        %1109 = vmatpush1.bf16.msra.mxu0 0
        %1110 = vmatprep.subr.bf16.mxu0 0
        %1111 = vmatpush1.bf16.msra.mxu0 0
        %1112 = vmatprep.subr.bf16.mxu0 0
        %1113 = vmatpush1.bf16.msra.mxu0 0
        %1114 = vmatprep.mubr.bf16.mxu0 0
        %1115 = vmatmul.mubr.bf16.gmra.mrb[0].mxu0 %v1080
        %v1116 = vpop.f32.mrb[0].mxu0
        %v1117 = vadd.f32 0.0, %v1116
        %v1118 = vpop.f32.mrb[0].mxu0
        %v1119 = vpop.f32.mrb[0].mxu0
        %v1120 = vadd.f32 0.0, %v1119
        %v1121 = vpop.f32.mrb[0].mxu0
        %1122 = vdwg.mxu0
        %1123 = vrot.lane.b32.xlu0 %v754, 80
        %v1124 = vpop.permute.xlu0 %1123
        %1125 = vrot.lane.b32.xlu0 %v755, 80
        %v1126 = vpop.permute.xlu0 %1125
        %v1128 = vsel %vm757, %v1124, 0
        %v1131 = vsel %vm757, %v1126, 0
        %1133 = vmatprep.subr.bf16.mxu0 0
        %1134 = vmatpush1.bf16.xpose.msra.mxu0 %v1131
        %1135 = vmatprep.subr.bf16.mxu0 0
        %1136 = vmatpush1.bf16.xpose.msra.mxu0 0
        %1137 = vmatprep.subr.bf16.mxu0 0
        %1138 = vmatpush1.bf16.xpose.msra.mxu0 0
        %1139 = vmatprep.subr.bf16.mxu0 0
        %1140 = vmatpush1.bf16.xpose.msra.mxu0 0
        %1141 = vmatprep.subr.bf16.mxu0 0
        %1142 = vmatpush1.bf16.xpose.msra.mxu0 0
        %1143 = vmatprep.subr.bf16.mxu0 0
        %1144 = vmatpush1.bf16.xpose.msra.mxu0 0
        %1145 = vmatprep.subr.bf16.mxu0 0
        %1146 = vmatpush1.bf16.xpose.msra.mxu0 0
        %1147 = vmatprep.subr.bf16.mxu0 0
        %1148 = vmatpush1.bf16.xpose.msra.mxu0 0
        %1149 = vmatprep.subr.bf16.mxu0 0
        %1150 = vmatpush1.bf16.xpose.msra.mxu0 0
        %1151 = vmatprep.subr.bf16.mxu0 0
        %1152 = vmatpush1.bf16.xpose.msra.mxu0 0
        %1153 = vmatprep.subr.bf16.mxu0 0
        %1154 = vmatpush1.bf16.xpose.msra.mxu0 0
        %1155 = vmatprep.subr.bf16.mxu0 0
        %1156 = vmatpush1.bf16.xpose.msra.mxu0 0
        %1157 = vmatprep.subr.bf16.mxu0 0
        %1158 = vmatpush1.bf16.xpose.msra.mxu0 0
        %1159 = vmatprep.subr.bf16.mxu0 0
        %1160 = vmatpush1.bf16.xpose.msra.mxu0 0
        %1161 = vmatprep.subr.bf16.mxu0 0
        %1162 = vmatpush1.bf16.xpose.msra.mxu0 0
        %1163 = vmatprep.subr.bf16.mxu0 0
        %1164 = vmatpush1.bf16.xpose.msra.mxu0 0
        %1165 = vmatprep.mubr.bf16.mxu0 0
        %1166 = vmatmul.mubr.bf16.gmra.mrb[0].mxu0 %v1128
        %v1167 = vpop.f32.mrb[0].mxu0
        %v1168 = vadd.f32 0.0, %v1167
        %v1169 = vpop.f32.mrb[0].mxu0
        %v1170 = vpop.f32.mrb[0].mxu0
        %v1171 = vadd.f32 0.0, %v1170
        %v1172 = vpop.f32.mrb[0].mxu0
        %1173 = vdwg.mxu0
        %v1174 = vmul.f32 %v1168, 0.25
        %v1175 = vmul.f32 %v1171, 0.25
        %v1176 = vsel %vm757, %v1174, -inf
        %1177 = vmax.xlane.f32.xlu0 %v1176
        %v1178 = vpop.xlane.xlu0 %1177
        %v1179 = vsel %vm757, %v1175, -inf
        %1180 = vmax.xlane.f32.xlu0 %v1179
        %v1181 = vpop.xlane.xlu0 %1180
        %v1182 = vsub.f32 %v1174, %v1178
        %v1183 = vsub.f32 %v1175, %v1181
        %v1184 = vmul.f32 %v1182, 1.442695
        %v1185 = vpow.pop %v1184
        %v1186 = vmul.f32 %v1183, 1.442695
        %v1187 = vpow.pop %v1186
        %v1188 = vsel %vm757, %v1185, 0.0
        %1189 = vadd.xlane.f32.xlu0 %v1188
        %v1190 = vpop.xlane.xlu0 %1189
        %v1191 = vsel %vm757, %v1187, 0.0
        %1192 = vadd.xlane.f32.xlu0 %v1191
        %v1193 = vpop.xlane.xlu0 %1192
        %v1194 = vrcp.pop %v1190
        %v1195 = vrcp.pop %v1193
        %v1196 = vmul.f32 %v1185, %v1194
        %v1197 = vmul.f32 %v1187, %v1195
        %v1198 = vpack.c.bf16 %v1197, %v1196
        %1199 = vrot.lane.b32.xlu0 %v756, 80
        %v1200 = vpop.permute.xlu0 %1199
        %v1203 = vsel %vm757, %v1198, 0
        %1205 = vmatprep.subr.bf16.mxu0 0
        %1206 = vmatpush1.bf16.msra.mxu0 %v1200
        %1207 = vmatprep.subr.bf16.mxu0 0
        %1208 = vmatpush1.bf16.msra.mxu0 0
        %1209 = vmatprep.subr.bf16.mxu0 0
        %1210 = vmatpush1.bf16.msra.mxu0 0
        %1211 = vmatprep.subr.bf16.mxu0 0
        %1212 = vmatpush1.bf16.msra.mxu0 0
        %1213 = vmatprep.subr.bf16.mxu0 0
        %1214 = vmatpush1.bf16.msra.mxu0 0
        %1215 = vmatprep.subr.bf16.mxu0 0
        %1216 = vmatpush1.bf16.msra.mxu0 0
        %1217 = vmatprep.subr.bf16.mxu0 0
        %1218 = vmatpush1.bf16.msra.mxu0 0
        %1219 = vmatprep.subr.bf16.mxu0 0
        %1220 = vmatpush1.bf16.msra.mxu0 0
        %1221 = vmatprep.subr.bf16.mxu0 0
        %1222 = vmatpush1.bf16.msra.mxu0 0
        %1223 = vmatprep.subr.bf16.mxu0 0
        %1224 = vmatpush1.bf16.msra.mxu0 0
        %1225 = vmatprep.subr.bf16.mxu0 0
        %1226 = vmatpush1.bf16.msra.mxu0 0
        %1227 = vmatprep.subr.bf16.mxu0 0
        %1228 = vmatpush1.bf16.msra.mxu0 0
        %1229 = vmatprep.subr.bf16.mxu0 0
        %1230 = vmatpush1.bf16.msra.mxu0 0
        %1231 = vmatprep.subr.bf16.mxu0 0
        %1232 = vmatpush1.bf16.msra.mxu0 0
        %1233 = vmatprep.subr.bf16.mxu0 0
        %1234 = vmatpush1.bf16.msra.mxu0 0
        %1235 = vmatprep.subr.bf16.mxu0 0
        %1236 = vmatpush1.bf16.msra.mxu0 0
        %1237 = vmatprep.mubr.bf16.mxu0 0
        %1238 = vmatmul.mubr.bf16.gmra.mrb[0].mxu0 %v1203
        %v1239 = vpop.f32.mrb[0].mxu0
        %v1240 = vadd.f32 0.0, %v1239
        %v1241 = vpop.f32.mrb[0].mxu0
        %v1242 = vpop.f32.mrb[0].mxu0
        %v1243 = vadd.f32 0.0, %v1242
        %v1244 = vpop.f32.mrb[0].mxu0
        %1245 = vdwg.mxu0
        %1246 = vrot.lane.b32.xlu0 %v754, 64
        %v1247 = vpop.permute.xlu0 %1246
        %1248 = vrot.lane.b32.xlu0 %v755, 64
        %v1249 = vpop.permute.xlu0 %1248
        %v1251 = vsel %vm757, %v1247, 0
        %v1254 = vsel %vm757, %v1249, 0
        %1256 = vmatprep.subr.bf16.mxu0 0
        %1257 = vmatpush1.bf16.xpose.msra.mxu0 %v1254
        %1258 = vmatprep.subr.bf16.mxu0 0
        %1259 = vmatpush1.bf16.xpose.msra.mxu0 0
        %1260 = vmatprep.subr.bf16.mxu0 0
        %1261 = vmatpush1.bf16.xpose.msra.mxu0 0
        %1262 = vmatprep.subr.bf16.mxu0 0
        %1263 = vmatpush1.bf16.xpose.msra.mxu0 0
        %1264 = vmatprep.subr.bf16.mxu0 0
        %1265 = vmatpush1.bf16.xpose.msra.mxu0 0
        %1266 = vmatprep.subr.bf16.mxu0 0
        %1267 = vmatpush1.bf16.xpose.msra.mxu0 0
        %1268 = vmatprep.subr.bf16.mxu0 0
        %1269 = vmatpush1.bf16.xpose.msra.mxu0 0
        %1270 = vmatprep.subr.bf16.mxu0 0
        %1271 = vmatpush1.bf16.xpose.msra.mxu0 0
        %1272 = vmatprep.subr.bf16.mxu0 0
        %1273 = vmatpush1.bf16.xpose.msra.mxu0 0
        %1274 = vmatprep.subr.bf16.mxu0 0
        %1275 = vmatpush1.bf16.xpose.msra.mxu0 0
        %1276 = vmatprep.subr.bf16.mxu0 0
        %1277 = vmatpush1.bf16.xpose.msra.mxu0 0
        %1278 = vmatprep.subr.bf16.mxu0 0
        %1279 = vmatpush1.bf16.xpose.msra.mxu0 0
        %1280 = vmatprep.subr.bf16.mxu0 0
        %1281 = vmatpush1.bf16.xpose.msra.mxu0 0
        %1282 = vmatprep.subr.bf16.mxu0 0
        %1283 = vmatpush1.bf16.xpose.msra.mxu0 0
        %1284 = vmatprep.subr.bf16.mxu0 0
        %1285 = vmatpush1.bf16.xpose.msra.mxu0 0
        %1286 = vmatprep.subr.bf16.mxu0 0
        %1287 = vmatpush1.bf16.xpose.msra.mxu0 0
        %1288 = vmatprep.mubr.bf16.mxu0 0
        %1289 = vmatmul.mubr.bf16.gmra.mrb[0].mxu0 %v1251
        %v1290 = vpop.f32.mrb[0].mxu0
        %v1291 = vadd.f32 0.0, %v1290
        %v1292 = vpop.f32.mrb[0].mxu0
        %v1293 = vpop.f32.mrb[0].mxu0
        %v1294 = vadd.f32 0.0, %v1293
        %v1295 = vpop.f32.mrb[0].mxu0
        %1296 = vdwg.mxu0
        %v1297 = vmul.f32 %v1291, 0.25
        %v1298 = vmul.f32 %v1294, 0.25
        %v1299 = vsel %vm757, %v1297, -inf
        %1300 = vmax.xlane.f32.xlu0 %v1299
        %v1301 = vpop.xlane.xlu0 %1300
        %v1302 = vsel %vm757, %v1298, -inf
        %1303 = vmax.xlane.f32.xlu0 %v1302
        %v1304 = vpop.xlane.xlu0 %1303
        %v1305 = vsub.f32 %v1297, %v1301
        %v1306 = vsub.f32 %v1298, %v1304
        %v1307 = vmul.f32 %v1305, 1.442695
        %v1308 = vpow.pop %v1307
        %v1309 = vmul.f32 %v1306, 1.442695
        %v1310 = vpow.pop %v1309
        %v1311 = vsel %vm757, %v1308, 0.0
        %1312 = vadd.xlane.f32.xlu0 %v1311
        %v1313 = vpop.xlane.xlu0 %1312
        %v1314 = vsel %vm757, %v1310, 0.0
        %1315 = vadd.xlane.f32.xlu0 %v1314
        %v1316 = vpop.xlane.xlu0 %1315
        %v1317 = vrcp.pop %v1313
        %v1318 = vrcp.pop %v1316
        %v1319 = vmul.f32 %v1308, %v1317
        %v1320 = vmul.f32 %v1310, %v1318
        %v1321 = vpack.c.bf16 %v1320, %v1319
        %1322 = vrot.lane.b32.xlu0 %v756, 64
        %v1323 = vpop.permute.xlu0 %1322
        %v1326 = vsel %vm757, %v1321, 0
        %1328 = vmatprep.subr.bf16.mxu0 0
        %1329 = vmatpush1.bf16.msra.mxu0 %v1323
        %1330 = vmatprep.subr.bf16.mxu0 0
        %1331 = vmatpush1.bf16.msra.mxu0 0
        %1332 = vmatprep.subr.bf16.mxu0 0
        %1333 = vmatpush1.bf16.msra.mxu0 0
        %1334 = vmatprep.subr.bf16.mxu0 0
        %1335 = vmatpush1.bf16.msra.mxu0 0
        %1336 = vmatprep.subr.bf16.mxu0 0
        %1337 = vmatpush1.bf16.msra.mxu0 0
        %1338 = vmatprep.subr.bf16.mxu0 0
        %1339 = vmatpush1.bf16.msra.mxu0 0
        %1340 = vmatprep.subr.bf16.mxu0 0
        %1341 = vmatpush1.bf16.msra.mxu0 0
        %1342 = vmatprep.subr.bf16.mxu0 0
        %1343 = vmatpush1.bf16.msra.mxu0 0
        %1344 = vmatprep.subr.bf16.mxu0 0
        %1345 = vmatpush1.bf16.msra.mxu0 0
        %1346 = vmatprep.subr.bf16.mxu0 0
        %1347 = vmatpush1.bf16.msra.mxu0 0
        %1348 = vmatprep.subr.bf16.mxu0 0
        %1349 = vmatpush1.bf16.msra.mxu0 0
        %1350 = vmatprep.subr.bf16.mxu0 0
        %1351 = vmatpush1.bf16.msra.mxu0 0
        %1352 = vmatprep.subr.bf16.mxu0 0
        %1353 = vmatpush1.bf16.msra.mxu0 0
        %1354 = vmatprep.subr.bf16.mxu0 0
        %1355 = vmatpush1.bf16.msra.mxu0 0
        %1356 = vmatprep.subr.bf16.mxu0 0
        %1357 = vmatpush1.bf16.msra.mxu0 0
        %1358 = vmatprep.subr.bf16.mxu0 0
        %1359 = vmatpush1.bf16.msra.mxu0 0
        %1360 = vmatprep.mubr.bf16.mxu0 0
        %1361 = vmatmul.mubr.bf16.gmra.mrb[0].mxu0 %v1326
        %v1362 = vpop.f32.mrb[0].mxu0
        %v1363 = vadd.f32 0.0, %v1362
        %v1364 = vpop.f32.mrb[0].mxu0
        %v1365 = vpop.f32.mrb[0].mxu0
        %v1366 = vadd.f32 0.0, %v1365
        %v1367 = vpop.f32.mrb[0].mxu0
        %1368 = vdwg.mxu0
        %1369 = vrot.lane.b32.xlu0 %v754, 48
        %v1370 = vpop.permute.xlu0 %1369
        %1371 = vrot.lane.b32.xlu0 %v755, 48
        %v1372 = vpop.permute.xlu0 %1371
        %v1374 = vsel %vm757, %v1370, 0
        %v1377 = vsel %vm757, %v1372, 0
        %1379 = vmatprep.subr.bf16.mxu0 0
        %1380 = vmatpush1.bf16.xpose.msra.mxu0 %v1377
        %1381 = vmatprep.subr.bf16.mxu0 0
        %1382 = vmatpush1.bf16.xpose.msra.mxu0 0
        %1383 = vmatprep.subr.bf16.mxu0 0
        %1384 = vmatpush1.bf16.xpose.msra.mxu0 0
        %1385 = vmatprep.subr.bf16.mxu0 0
        %1386 = vmatpush1.bf16.xpose.msra.mxu0 0
        %1387 = vmatprep.subr.bf16.mxu0 0
        %1388 = vmatpush1.bf16.xpose.msra.mxu0 0
        %1389 = vmatprep.subr.bf16.mxu0 0
        %1390 = vmatpush1.bf16.xpose.msra.mxu0 0
        %1391 = vmatprep.subr.bf16.mxu0 0
        %1392 = vmatpush1.bf16.xpose.msra.mxu0 0
        %1393 = vmatprep.subr.bf16.mxu0 0
        %1394 = vmatpush1.bf16.xpose.msra.mxu0 0
        %1395 = vmatprep.subr.bf16.mxu0 0
        %1396 = vmatpush1.bf16.xpose.msra.mxu0 0
        %1397 = vmatprep.subr.bf16.mxu0 0
        %1398 = vmatpush1.bf16.xpose.msra.mxu0 0
        %1399 = vmatprep.subr.bf16.mxu0 0
        %1400 = vmatpush1.bf16.xpose.msra.mxu0 0
        %1401 = vmatprep.subr.bf16.mxu0 0
        %1402 = vmatpush1.bf16.xpose.msra.mxu0 0
        %1403 = vmatprep.subr.bf16.mxu0 0
        %1404 = vmatpush1.bf16.xpose.msra.mxu0 0
        %1405 = vmatprep.subr.bf16.mxu0 0
        %1406 = vmatpush1.bf16.xpose.msra.mxu0 0
        %1407 = vmatprep.subr.bf16.mxu0 0
        %1408 = vmatpush1.bf16.xpose.msra.mxu0 0
        %1409 = vmatprep.subr.bf16.mxu0 0
        %1410 = vmatpush1.bf16.xpose.msra.mxu0 0
        %1411 = vmatprep.mubr.bf16.mxu0 0
        %1412 = vmatmul.mubr.bf16.gmra.mrb[0].mxu0 %v1374
        %v1413 = vpop.f32.mrb[0].mxu0
        %v1414 = vadd.f32 0.0, %v1413
        %v1415 = vpop.f32.mrb[0].mxu0
        %v1416 = vpop.f32.mrb[0].mxu0
        %v1417 = vadd.f32 0.0, %v1416
        %v1418 = vpop.f32.mrb[0].mxu0
        %1419 = vdwg.mxu0
        %v1420 = vmul.f32 %v1414, 0.25
        %v1421 = vmul.f32 %v1417, 0.25
        %v1422 = vsel %vm757, %v1420, -inf
        %1423 = vmax.xlane.f32.xlu0 %v1422
        %v1424 = vpop.xlane.xlu0 %1423
        %v1425 = vsel %vm757, %v1421, -inf
        %1426 = vmax.xlane.f32.xlu0 %v1425
        %v1427 = vpop.xlane.xlu0 %1426
        %v1428 = vsub.f32 %v1420, %v1424
        %v1429 = vsub.f32 %v1421, %v1427
        %v1430 = vmul.f32 %v1428, 1.442695
        %v1431 = vpow.pop %v1430
        %v1432 = vmul.f32 %v1429, 1.442695
        %v1433 = vpow.pop %v1432
        %v1434 = vsel %vm757, %v1431, 0.0
        %1435 = vadd.xlane.f32.xlu0 %v1434
        %v1436 = vpop.xlane.xlu0 %1435
        %v1437 = vsel %vm757, %v1433, 0.0
        %1438 = vadd.xlane.f32.xlu0 %v1437
        %v1439 = vpop.xlane.xlu0 %1438
        %v1440 = vrcp.pop %v1436
        %v1441 = vrcp.pop %v1439
        %v1442 = vmul.f32 %v1431, %v1440
        %v1443 = vmul.f32 %v1433, %v1441
        %v1444 = vpack.c.bf16 %v1443, %v1442
        %1445 = vrot.lane.b32.xlu0 %v756, 48
        %v1446 = vpop.permute.xlu0 %1445
        %v1449 = vsel %vm757, %v1444, 0
        %1451 = vmatprep.subr.bf16.mxu0 0
        %1452 = vmatpush1.bf16.msra.mxu0 %v1446
        %1453 = vmatprep.subr.bf16.mxu0 0
        %1454 = vmatpush1.bf16.msra.mxu0 0
        %1455 = vmatprep.subr.bf16.mxu0 0
        %1456 = vmatpush1.bf16.msra.mxu0 0
        %1457 = vmatprep.subr.bf16.mxu0 0
        %1458 = vmatpush1.bf16.msra.mxu0 0
        %1459 = vmatprep.subr.bf16.mxu0 0
        %1460 = vmatpush1.bf16.msra.mxu0 0
        %1461 = vmatprep.subr.bf16.mxu0 0
        %1462 = vmatpush1.bf16.msra.mxu0 0
        %1463 = vmatprep.subr.bf16.mxu0 0
        %1464 = vmatpush1.bf16.msra.mxu0 0
        %1465 = vmatprep.subr.bf16.mxu0 0
        %1466 = vmatpush1.bf16.msra.mxu0 0
        %1467 = vmatprep.subr.bf16.mxu0 0
        %1468 = vmatpush1.bf16.msra.mxu0 0
        %1469 = vmatprep.subr.bf16.mxu0 0
        %1470 = vmatpush1.bf16.msra.mxu0 0
        %1471 = vmatprep.subr.bf16.mxu0 0
        %1472 = vmatpush1.bf16.msra.mxu0 0
        %1473 = vmatprep.subr.bf16.mxu0 0
        %1474 = vmatpush1.bf16.msra.mxu0 0
        %1475 = vmatprep.subr.bf16.mxu0 0
        %1476 = vmatpush1.bf16.msra.mxu0 0
        %1477 = vmatprep.subr.bf16.mxu0 0
        %1478 = vmatpush1.bf16.msra.mxu0 0
        %1479 = vmatprep.subr.bf16.mxu0 0
        %1480 = vmatpush1.bf16.msra.mxu0 0
        %1481 = vmatprep.subr.bf16.mxu0 0
        %1482 = vmatpush1.bf16.msra.mxu0 0
        %1483 = vmatprep.mubr.bf16.mxu0 0
        %1484 = vmatmul.mubr.bf16.gmra.mrb[0].mxu0 %v1449
        %v1485 = vpop.f32.mrb[0].mxu0
        %v1486 = vadd.f32 0.0, %v1485
        %v1487 = vpop.f32.mrb[0].mxu0
        %v1488 = vpop.f32.mrb[0].mxu0
        %v1489 = vadd.f32 0.0, %v1488
        %v1490 = vpop.f32.mrb[0].mxu0
        %1491 = vdwg.mxu0
        %1492 = vrot.lane.b32.xlu0 %v754, 32
        %v1493 = vpop.permute.xlu0 %1492
        %1494 = vrot.lane.b32.xlu0 %v755, 32
        %v1495 = vpop.permute.xlu0 %1494
        %v1497 = vsel %vm757, %v1493, 0
        %v1500 = vsel %vm757, %v1495, 0
        %1502 = vmatprep.subr.bf16.mxu0 0
        %1503 = vmatpush1.bf16.xpose.msra.mxu0 %v1500
        %1504 = vmatprep.subr.bf16.mxu0 0
        %1505 = vmatpush1.bf16.xpose.msra.mxu0 0
        %1506 = vmatprep.subr.bf16.mxu0 0
        %1507 = vmatpush1.bf16.xpose.msra.mxu0 0
        %1508 = vmatprep.subr.bf16.mxu0 0
        %1509 = vmatpush1.bf16.xpose.msra.mxu0 0
        %1510 = vmatprep.subr.bf16.mxu0 0
        %1511 = vmatpush1.bf16.xpose.msra.mxu0 0
        %1512 = vmatprep.subr.bf16.mxu0 0
        %1513 = vmatpush1.bf16.xpose.msra.mxu0 0
        %1514 = vmatprep.subr.bf16.mxu0 0
        %1515 = vmatpush1.bf16.xpose.msra.mxu0 0
        %1516 = vmatprep.subr.bf16.mxu0 0
        %1517 = vmatpush1.bf16.xpose.msra.mxu0 0
        %1518 = vmatprep.subr.bf16.mxu0 0
        %1519 = vmatpush1.bf16.xpose.msra.mxu0 0
        %1520 = vmatprep.subr.bf16.mxu0 0
        %1521 = vmatpush1.bf16.xpose.msra.mxu0 0
        %1522 = vmatprep.subr.bf16.mxu0 0
        %1523 = vmatpush1.bf16.xpose.msra.mxu0 0
        %1524 = vmatprep.subr.bf16.mxu0 0
        %1525 = vmatpush1.bf16.xpose.msra.mxu0 0
        %1526 = vmatprep.subr.bf16.mxu0 0
        %1527 = vmatpush1.bf16.xpose.msra.mxu0 0
        %1528 = vmatprep.subr.bf16.mxu0 0
        %1529 = vmatpush1.bf16.xpose.msra.mxu0 0
        %1530 = vmatprep.subr.bf16.mxu0 0
        %1531 = vmatpush1.bf16.xpose.msra.mxu0 0
        %1532 = vmatprep.subr.bf16.mxu0 0
        %1533 = vmatpush1.bf16.xpose.msra.mxu0 0
        %1534 = vmatprep.mubr.bf16.mxu0 0
        %1535 = vmatmul.mubr.bf16.gmra.mrb[0].mxu0 %v1497
        %v1536 = vpop.f32.mrb[0].mxu0
        %v1537 = vadd.f32 0.0, %v1536
        %v1538 = vpop.f32.mrb[0].mxu0
        %v1539 = vpop.f32.mrb[0].mxu0
        %v1540 = vadd.f32 0.0, %v1539
        %v1541 = vpop.f32.mrb[0].mxu0
        %1542 = vdwg.mxu0
        %v1543 = vmul.f32 %v1537, 0.25
        %v1544 = vmul.f32 %v1540, 0.25
        %v1545 = vsel %vm757, %v1543, -inf
        %1546 = vmax.xlane.f32.xlu0 %v1545
        %v1547 = vpop.xlane.xlu0 %1546
        %v1548 = vsel %vm757, %v1544, -inf
        %1549 = vmax.xlane.f32.xlu0 %v1548
        %v1550 = vpop.xlane.xlu0 %1549
        %v1551 = vsub.f32 %v1543, %v1547
        %v1552 = vsub.f32 %v1544, %v1550
        %v1553 = vmul.f32 %v1551, 1.442695
        %v1554 = vpow.pop %v1553
        %v1555 = vmul.f32 %v1552, 1.442695
        %v1556 = vpow.pop %v1555
        %v1557 = vsel %vm757, %v1554, 0.0
        %1558 = vadd.xlane.f32.xlu0 %v1557
        %v1559 = vpop.xlane.xlu0 %1558
        %v1560 = vsel %vm757, %v1556, 0.0
        %1561 = vadd.xlane.f32.xlu0 %v1560
        %v1562 = vpop.xlane.xlu0 %1561
        %v1563 = vrcp.pop %v1559
        %v1564 = vrcp.pop %v1562
        %v1565 = vmul.f32 %v1554, %v1563
        %v1566 = vmul.f32 %v1556, %v1564
        %v1567 = vpack.c.bf16 %v1566, %v1565
        %1568 = vrot.lane.b32.xlu0 %v756, 32
        %v1569 = vpop.permute.xlu0 %1568
        %v1572 = vsel %vm757, %v1567, 0
        %1574 = vmatprep.subr.bf16.mxu0 0
        %1575 = vmatpush1.bf16.msra.mxu0 %v1569
        %1576 = vmatprep.subr.bf16.mxu0 0
        %1577 = vmatpush1.bf16.msra.mxu0 0
        %1578 = vmatprep.subr.bf16.mxu0 0
        %1579 = vmatpush1.bf16.msra.mxu0 0
        %1580 = vmatprep.subr.bf16.mxu0 0
        %1581 = vmatpush1.bf16.msra.mxu0 0
        %1582 = vmatprep.subr.bf16.mxu0 0
        %1583 = vmatpush1.bf16.msra.mxu0 0
        %1584 = vmatprep.subr.bf16.mxu0 0
        %1585 = vmatpush1.bf16.msra.mxu0 0
        %1586 = vmatprep.subr.bf16.mxu0 0
        %1587 = vmatpush1.bf16.msra.mxu0 0
        %1588 = vmatprep.subr.bf16.mxu0 0
        %1589 = vmatpush1.bf16.msra.mxu0 0
        %1590 = vmatprep.subr.bf16.mxu0 0
        %1591 = vmatpush1.bf16.msra.mxu0 0
        %1592 = vmatprep.subr.bf16.mxu0 0
        %1593 = vmatpush1.bf16.msra.mxu0 0
        %1594 = vmatprep.subr.bf16.mxu0 0
        %1595 = vmatpush1.bf16.msra.mxu0 0
        %1596 = vmatprep.subr.bf16.mxu0 0
        %1597 = vmatpush1.bf16.msra.mxu0 0
        %1598 = vmatprep.subr.bf16.mxu0 0
        %1599 = vmatpush1.bf16.msra.mxu0 0
        %1600 = vmatprep.subr.bf16.mxu0 0
        %1601 = vmatpush1.bf16.msra.mxu0 0
        %1602 = vmatprep.subr.bf16.mxu0 0
        %1603 = vmatpush1.bf16.msra.mxu0 0
        %1604 = vmatprep.subr.bf16.mxu0 0
        %1605 = vmatpush1.bf16.msra.mxu0 0
        %1606 = vmatprep.mubr.bf16.mxu0 0
        %1607 = vmatmul.mubr.bf16.gmra.mrb[0].mxu0 %v1572
        %v1608 = vpop.f32.mrb[0].mxu0
        %v1609 = vadd.f32 0.0, %v1608
        %v1610 = vpop.f32.mrb[0].mxu0
        %v1611 = vpop.f32.mrb[0].mxu0
        %v1612 = vadd.f32 0.0, %v1611
        %v1613 = vpop.f32.mrb[0].mxu0
        %1614 = vdwg.mxu0
        %1615 = vrot.lane.b32.xlu0 %v754, 16
        %v1616 = vpop.permute.xlu0 %1615
        %1617 = vrot.lane.b32.xlu0 %v755, 16
        %v1618 = vpop.permute.xlu0 %1617
        %v1620 = vsel %vm757, %v1616, 0
        %v1623 = vsel %vm757, %v1618, 0
        %1625 = vmatprep.subr.bf16.mxu0 0
        %1626 = vmatpush1.bf16.xpose.msra.mxu0 %v1623
        %1627 = vmatprep.subr.bf16.mxu0 0
        %1628 = vmatpush1.bf16.xpose.msra.mxu0 0
        %1629 = vmatprep.subr.bf16.mxu0 0
        %1630 = vmatpush1.bf16.xpose.msra.mxu0 0
        %1631 = vmatprep.subr.bf16.mxu0 0
        %1632 = vmatpush1.bf16.xpose.msra.mxu0 0
        %1633 = vmatprep.subr.bf16.mxu0 0
        %1634 = vmatpush1.bf16.xpose.msra.mxu0 0
        %1635 = vmatprep.subr.bf16.mxu0 0
        %1636 = vmatpush1.bf16.xpose.msra.mxu0 0
        %1637 = vmatprep.subr.bf16.mxu0 0
        %1638 = vmatpush1.bf16.xpose.msra.mxu0 0
        %1639 = vmatprep.subr.bf16.mxu0 0
        %1640 = vmatpush1.bf16.xpose.msra.mxu0 0
        %1641 = vmatprep.subr.bf16.mxu0 0
        %1642 = vmatpush1.bf16.xpose.msra.mxu0 0
        %1643 = vmatprep.subr.bf16.mxu0 0
        %1644 = vmatpush1.bf16.xpose.msra.mxu0 0
        %1645 = vmatprep.subr.bf16.mxu0 0
        %1646 = vmatpush1.bf16.xpose.msra.mxu0 0
        %1647 = vmatprep.subr.bf16.mxu0 0
        %1648 = vmatpush1.bf16.xpose.msra.mxu0 0
        %1649 = vmatprep.subr.bf16.mxu0 0
        %1650 = vmatpush1.bf16.xpose.msra.mxu0 0
        %1651 = vmatprep.subr.bf16.mxu0 0
        %1652 = vmatpush1.bf16.xpose.msra.mxu0 0
        %1653 = vmatprep.subr.bf16.mxu0 0
        %1654 = vmatpush1.bf16.xpose.msra.mxu0 0
        %1655 = vmatprep.subr.bf16.mxu0 0
        %1656 = vmatpush1.bf16.xpose.msra.mxu0 0
        %1657 = vmatprep.mubr.bf16.mxu0 0
        %1658 = vmatmul.mubr.bf16.gmra.mrb[0].mxu0 %v1620
        %v1659 = vpop.f32.mrb[0].mxu0
        %v1660 = vadd.f32 0.0, %v1659
        %v1661 = vpop.f32.mrb[0].mxu0
        %v1662 = vpop.f32.mrb[0].mxu0
        %v1663 = vadd.f32 0.0, %v1662
        %v1664 = vpop.f32.mrb[0].mxu0
        %1665 = vdwg.mxu0
        %v1666 = vmul.f32 %v1660, 0.25
        %v1667 = vmul.f32 %v1663, 0.25
        %v1668 = vsel %vm757, %v1666, -inf
        %1669 = vmax.xlane.f32.xlu0 %v1668
        %v1670 = vpop.xlane.xlu0 %1669
        %v1671 = vsel %vm757, %v1667, -inf
        %1672 = vmax.xlane.f32.xlu0 %v1671
        %v1673 = vpop.xlane.xlu0 %1672
        %v1674 = vsub.f32 %v1666, %v1670
        %v1675 = vsub.f32 %v1667, %v1673
        %v1676 = vmul.f32 %v1674, 1.442695
        %v1677 = vpow.pop %v1676
        %v1678 = vmul.f32 %v1675, 1.442695
        %v1679 = vpow.pop %v1678
        %v1680 = vsel %vm757, %v1677, 0.0
        %1681 = vadd.xlane.f32.xlu0 %v1680
        %v1682 = vpop.xlane.xlu0 %1681
        %v1683 = vsel %vm757, %v1679, 0.0
        %1684 = vadd.xlane.f32.xlu0 %v1683
        %v1685 = vpop.xlane.xlu0 %1684
        %v1686 = vrcp.pop %v1682
        %v1687 = vrcp.pop %v1685
        %v1688 = vmul.f32 %v1677, %v1686
        %v1689 = vmul.f32 %v1679, %v1687
        %v1690 = vpack.c.bf16 %v1689, %v1688
        %1691 = vrot.lane.b32.xlu0 %v756, 16
        %v1692 = vpop.permute.xlu0 %1691
        %v1695 = vsel %vm757, %v1690, 0
        %1697 = vmatprep.subr.bf16.mxu0 0
        %1698 = vmatpush1.bf16.msra.mxu0 %v1692
        %1699 = vmatprep.subr.bf16.mxu0 0
        %1700 = vmatpush1.bf16.msra.mxu0 0
        %1701 = vmatprep.subr.bf16.mxu0 0
        %1702 = vmatpush1.bf16.msra.mxu0 0
        %1703 = vmatprep.subr.bf16.mxu0 0
        %1704 = vmatpush1.bf16.msra.mxu0 0
        %1705 = vmatprep.subr.bf16.mxu0 0
        %1706 = vmatpush1.bf16.msra.mxu0 0
        %1707 = vmatprep.subr.bf16.mxu0 0
        %1708 = vmatpush1.bf16.msra.mxu0 0
        %1709 = vmatprep.subr.bf16.mxu0 0
        %1710 = vmatpush1.bf16.msra.mxu0 0
        %1711 = vmatprep.subr.bf16.mxu0 0
        %1712 = vmatpush1.bf16.msra.mxu0 0
        %1713 = vmatprep.subr.bf16.mxu0 0
        %1714 = vmatpush1.bf16.msra.mxu0 0
        %1715 = vmatprep.subr.bf16.mxu0 0
        %1716 = vmatpush1.bf16.msra.mxu0 0
        %1717 = vmatprep.subr.bf16.mxu0 0
        %1718 = vmatpush1.bf16.msra.mxu0 0
        %1719 = vmatprep.subr.bf16.mxu0 0
        %1720 = vmatpush1.bf16.msra.mxu0 0
        %1721 = vmatprep.subr.bf16.mxu0 0
        %1722 = vmatpush1.bf16.msra.mxu0 0
        %1723 = vmatprep.subr.bf16.mxu0 0
        %1724 = vmatpush1.bf16.msra.mxu0 0
        %1725 = vmatprep.subr.bf16.mxu0 0
        %1726 = vmatpush1.bf16.msra.mxu0 0
        %1727 = vmatprep.subr.bf16.mxu0 0
        %1728 = vmatpush1.bf16.msra.mxu0 0
        %1729 = vmatprep.mubr.bf16.mxu0 0
        %1730 = vmatmul.mubr.bf16.gmra.mrb[0].mxu0 %v1695
        %v1731 = vpop.f32.mrb[0].mxu0
        %v1732 = vadd.f32 0.0, %v1731
        %v1733 = vpop.f32.mrb[0].mxu0
        %v1734 = vpop.f32.mrb[0].mxu0
        %v1735 = vadd.f32 0.0, %v1734
        %v1736 = vpop.f32.mrb[0].mxu0
        %1737 = vdwg.mxu0
        %1740 = vrot.lane.b32.xlu0 %v994, 16
        %v1741 = vpop.permute.xlu0 %1740
        %1742 = vrot.lane.b32.xlu0 %v997, 16
        %v1743 = vpop.permute.xlu0 %1742
        %1748 = vrot.lane.b32.xlu0 %v1117, 32
        %v1749 = vpop.permute.xlu0 %1748
        %1750 = vrot.lane.b32.xlu0 %v1120, 32
        %v1751 = vpop.permute.xlu0 %1750
        %1756 = vrot.lane.b32.xlu0 %v1240, 48
        %v1757 = vpop.permute.xlu0 %1756
        %1758 = vrot.lane.b32.xlu0 %v1243, 48
        %v1759 = vpop.permute.xlu0 %1758
        %1764 = vrot.lane.b32.xlu0 %v1363, 64
        %v1765 = vpop.permute.xlu0 %1764
        %1766 = vrot.lane.b32.xlu0 %v1366, 64
        %v1767 = vpop.permute.xlu0 %1766
        %1772 = vrot.lane.b32.xlu0 %v1486, 80
        %v1773 = vpop.permute.xlu0 %1772
        %1774 = vrot.lane.b32.xlu0 %v1489, 80
        %v1775 = vpop.permute.xlu0 %1774
        %1780 = vrot.lane.b32.xlu0 %v1609, 96
        %v1781 = vpop.permute.xlu0 %1780
        %1782 = vrot.lane.b32.xlu0 %v1612, 96
        %v1783 = vpop.permute.xlu0 %1782
        %1788 = vrot.lane.b32.xlu0 %v1732, 112
        %v1789 = vpop.permute.xlu0 %1788
        %1790 = vrot.lane.b32.xlu0 %v1735, 112
        %v1791 = vpop.permute.xlu0 %1790
        %v1794 = vsel %vm757, %v868, %v1741
        %v1795 = vsel %vm757, %v871, %v1743
        %vm1796 = vcmask 261120
        %v1797 = vsel %vm1796, %v1794, %v1749
        %v1798 = vsel %vm1796, %v1795, %v1751
        %vm1799 = vcmask 392192
        %v1800 = vsel %vm1799, %v1797, %v1757
        %v1801 = vsel %vm1799, %v1798, %v1759
        %vm1802 = vcmask 523264
        %v1803 = vsel %vm1802, %v1800, %v1765
        %v1804 = vsel %vm1802, %v1801, %v1767
        %vm1805 = vcmask 654336
        %v1806 = vsel %vm1805, %v1803, %v1773
        %v1807 = vsel %vm1805, %v1804, %v1775
        %vm1808 = vcmask 785408
        %v1809 = vsel %vm1808, %v1806, %v1781
        %v1810 = vsel %vm1808, %v1807, %v1783
        %vm1811 = vcmask 916480
        %v1812 = vsel %vm1811, %v1809, %v1789
        %v1813 = vsel %vm1811, %v1810, %v1791
        %v1814 = vpack.c.bf16 %v1813, %v1812
        %v1815 = vld [vmem:[#allocation10] sm:$0xf]
        %v1816 = vld [vmem:[#allocation10 + $0x4] sm:$0xf]
        %v1817 = vld [vmem:[#allocation10 + $0x8] sm:$0xf]
        %v1818 = vld [vmem:[#allocation10 + $0xc] sm:$0xf]
        %v1819 = vld [vmem:[#allocation10 + $0x10] sm:$0xf]
        %v1820 = vld [vmem:[#allocation10 + $0x14] sm:$0xf]
        %v1821 = vld [vmem:[#allocation10 + $0x18] sm:$0xf]
        %v1822 = vld [vmem:[#allocation10 + $0x1c] sm:$0xf]
        %v1823 = vld [vmem:[#allocation10 + $0x20] sm:$0xf]
        %v1824 = vld [vmem:[#allocation10 + $0x24] sm:$0xf]
        %v1825 = vld [vmem:[#allocation10 + $0x28] sm:$0xf]
        %v1826 = vld [vmem:[#allocation10 + $0x2c] sm:$0xf]
        %v1827 = vld [vmem:[#allocation10 + $0x30] sm:$0xf]
        %v1828 = vld [vmem:[#allocation10 + $0x34] sm:$0xf]
        %v1829 = vld [vmem:[#allocation10 + $0x38] sm:$0xf]
        %v1830 = vld [vmem:[#allocation10 + $0x3c] sm:$0xf]
        %v1831 = vld [vmem:[%s8] sm:$0x1]
        %v1833 = vlaneseq
        %v1834 = vshrl.u32 %v1833, 7
        %v1835 = vsub.s32 0, %v1834
        %v1836 = vrot.slane %v1831, %v1835
        %v1854 = vunpack.c.l.b16 %v1815
        %v1855 = vunpack.c.l.b16 %v1816
        %v1856 = vunpack.c.l.b16 %v1817
        %v1857 = vunpack.c.l.b16 %v1818
        %v1858 = vunpack.c.l.b16 %v1819
        %v1859 = vunpack.c.l.b16 %v1820
        %v1860 = vunpack.c.l.b16 %v1821
        %v1861 = vunpack.c.l.b16 %v1822
        %v1862 = vunpack.c.l.b16 %v1823
        %v1863 = vunpack.c.l.b16 %v1824
        %v1864 = vunpack.c.l.b16 %v1825
        %v1865 = vunpack.c.l.b16 %v1826
        %v1866 = vunpack.c.l.b16 %v1827
        %v1867 = vunpack.c.l.b16 %v1828
        %v1868 = vunpack.c.l.b16 %v1829
        %v1869 = vunpack.c.l.b16 %v1830
        %v1870 = vpack.c.b16 %v1855, %v1854
        %v1871 = vpack.c.b16 %v1857, %v1856
        %v1872 = vpack.c.b16 %v1859, %v1858
        %v1873 = vpack.c.b16 %v1861, %v1860
        %v1874 = vpack.c.b16 %v1863, %v1862
        %v1875 = vpack.c.b16 %v1865, %v1864
        %v1876 = vpack.c.b16 %v1867, %v1866
        %v1877 = vpack.c.b16 %v1869, %v1868
        %1886 = vmatprep.subr.bf16.mxu0 0
        %1887 = vmatpush1.bf16.msra.mxu0 %v1870
        %1888 = vmatprep.subr.bf16.mxu0 0
        %1889 = vmatpush1.bf16.msra.mxu0 %v1871
        %1890 = vmatprep.subr.bf16.mxu0 0
        %1891 = vmatpush1.bf16.msra.mxu0 %v1872
        %1892 = vmatprep.subr.bf16.mxu0 0
        %1893 = vmatpush1.bf16.msra.mxu0 %v1873
        %1894 = vmatprep.subr.bf16.mxu0 0
        %1895 = vmatpush1.bf16.msra.mxu0 %v1874
        %1896 = vmatprep.subr.bf16.mxu0 0
        %1897 = vmatpush1.bf16.msra.mxu0 %v1875
        %1898 = vmatprep.subr.bf16.mxu0 0
        %1899 = vmatpush1.bf16.msra.mxu0 %v1876
        %1900 = vmatprep.subr.bf16.mxu0 0
        %1901 = vmatpush1.bf16.msra.mxu0 %v1877
        %1902 = vmatprep.subr.bf16.mxu0 0
        %1903 = vmatpush1.bf16.msra.mxu0 0
        %1904 = vmatprep.subr.bf16.mxu0 0
        %1905 = vmatpush1.bf16.msra.mxu0 0
        %1906 = vmatprep.subr.bf16.mxu0 0
        %1907 = vmatpush1.bf16.msra.mxu0 0
        %1908 = vmatprep.subr.bf16.mxu0 0
        %1909 = vmatpush1.bf16.msra.mxu0 0
        %1910 = vmatprep.subr.bf16.mxu0 0
        %1911 = vmatpush1.bf16.msra.mxu0 0
        %1912 = vmatprep.subr.bf16.mxu0 0
        %1913 = vmatpush1.bf16.msra.mxu0 0
        %1914 = vmatprep.subr.bf16.mxu0 0
        %1915 = vmatpush1.bf16.msra.mxu0 0
        %1916 = vmatprep.subr.bf16.mxu0 0
        %1917 = vmatpush1.bf16.msra.mxu0 0
        %1918 = vmatprep.mubr.bf16.mxu0 0
        %1919 = vmatmul.mubr.bf16.gmra.mrb[0].mxu0 %v1814
        %v1920 = vpop.f32.mrb[0].mxu0
        %v1921 = vadd.f32 %v1836, %v1920
        %v1922 = vpop.f32.mrb[0].mxu0
        %v1923 = vpop.f32.mrb[0].mxu0
        %v1924 = vadd.f32 %v1836, %v1923
        %v1925 = vpop.f32.mrb[0].mxu0
        %1926 = vdwg.mxu0
        %1927 = vst [vmem:[%s408] sm:$0xff] %v1921
        %1928 = vst [vmem:[%s408 + $0x8] sm:$0xff] %v1924
        %s1929 = sand.u32 %s230, 1
        %s1930 = scalar_lea.sflag [#allocation4], %s1929
        %s1931 = sand.u32 %s230, 1
        %s1932 = smul.addr %s1931, 16
        %s1933 = scalar_lea.vmem [#allocation11], %s1932
        // Predicated region
        $region77: #{tpu_custom_call.1} parent=55 // pred_check
          %p1934 = pneg %p240
        $region78: #{tpu_custom_call.1} parent=55 // pred_check_branch
          %1936 = sbr.rel (%p1934) target = $region80
        $region79: #{tpu_custom_call.1} parent=55 // pred_region
          %s1938 = ssub.s32 256, 256
          %1939 = vsyncadd %s1930, %s1938
          %s1940 = smul.addr %s28, 2
          %s1941 = smul.addr %s1940, 128
          %s1942 = scalar_lea.hbm %s9, %s1941
          %s1943 = sshll.u32 %s1933, 4
          %s1944 = int_to_ptr.vmem [resolvable:$true] %s1943
          %1949 = dma.vmem_to_hbm [thread:$0]  %s1944, 256, %s1942, %s1930, 128, 128, 8
        $region80: #{tpu_custom_call.1} parent=55 // pred_fallthru
          _
      $region56: #{tpu_custom_call.1} parent=5 // pred_fallthru
        _
      %p1950 = scmp.le.s32.totalorder 2, %s23
      // Predicated region
      $region81: #{tpu_custom_call.1} parent=5 // pred_check
        %p1951 = pneg %p1950
      $region82: #{tpu_custom_call.1} parent=5 // pred_check_branch
        %1953 = sbr.rel (%p1951) target = $region84
      $region83: #{tpu_custom_call.1} parent=5 // pred_region
        %s1954 = ssub.s32 %s23, 2
        // Predicated region
        $region85: #{tpu_custom_call.1} parent=83 // pred_check
          %p1955 = pneg %p246
        $region86: #{tpu_custom_call.1} parent=83 // pred_check_branch
          %1957 = sbr.rel (%p1955) target = $region88
        $region87: #{tpu_custom_call.1} parent=83 // pred_region
          %s1958 = sand.u32 %s231, 1
          %s1959 = scalar_lea.sflag [#allocation4], %s1958
          %s1960 = sand.u32 %s231, 1
          %s1961 = smul.addr %s1960, 16
          %s1962 = scalar_lea.vmem [#allocation11], %s1961
          %1963 = dma.done %s1959, 256
        $region88: #{tpu_custom_call.1} parent=83 // pred_fallthru
          _
      $region84: #{tpu_custom_call.1} parent=5 // pred_fallthru
        _
    $region6: #{tpu_custom_call.1} parent=1 // loop_footer
      %s27 = sadd.s32 1, %s23
    $region7: #{tpu_custom_call.1} parent=1 // loop_footer_branch
      %22 = sbr.rel target = $region3
    $region8: #{tpu_custom_call.1} parent=1 // loop_exit
      _
    %1964 = vsyncpa [#allocation3], 1
    %s1965 = scalar_lea.sflag [#allocation3], 1
    %1966 = vsyncpa %s1965, 1
    %1967 = vsyncpa [#allocation6], 1
    %1968 = vsyncpa [#allocation9], 1
    %1969 = vsyncpa [#allocation4], 1
    %s1970 = scalar_lea.sflag [#allocation4], 1
    %1971 = vsyncpa %s1970, 1

</llo_original>
